<compile_context>
chip_gen: v6e
topology: v6e:2x2x1
jax: 0.10.0
libtpu: 0.0.40
codegen_flags: <defaults>
</compile_context>

<pallas_src>
import functools
import math

import jax
import jax.numpy as jnp
from jax import lax
from jax.experimental import pallas as pl
from jax.experimental.pallas import tpu as pltpu


# ----------------------------------------------------------------------------
# Deterministic synthetic calibrated camera parameters (shapes per __init__).
# ----------------------------------------------------------------------------
CAMERA_PARAMS = {
    "SonyA7S2": {
        "Kmin": 0.25,
        "Kmax": 16.0,
        "Gaussian": {"slope": 0.85, "bias": -0.50, "sigma": 0.10},
        "Row": {"slope": 0.75, "bias": -2.00, "sigma": 0.10},
        "ColorBias": [
            [0.010, 0.020, 0.015, 0.012],
            [0.020, 0.030, 0.025, 0.022],
            [0.030, 0.040, 0.035, 0.032],
            [0.040, 0.050, 0.045, 0.042],
        ],
    },
    "NikonD850": {
        "Kmin": 0.50,
        "Kmax": 8.0,
        "Gaussian": {"slope": 0.90, "bias": -0.70, "sigma": 0.08},
        "Row": {"slope": 0.70, "bias": -2.20, "sigma": 0.12},
        "ColorBias": [
            [0.005, 0.010, 0.008, 0.006],
            [0.015, 0.020, 0.018, 0.016],
            [0.025, 0.030, 0.028, 0.026],
            [0.035, 0.040, 0.038, 0.036],
        ],
    },
}


# ----------------------------------------------------------------------------
# Counter-hash RNG + inverse-CDF normals (pure jnp/lax; no pltpu primitives).
# ----------------------------------------------------------------------------
def _to_i32_const(x):
    x &= 0xFFFFFFFF
    return x - (1 << 32) if x >= (1 << 31) else x


_M1 = _to_i32_const(0x7FEB352D)
_M2 = _to_i32_const(0x846CA68B)
_INV_2_24 = float(1.0 / (1 << 24))


def _shr_logical(x, k):
    """Logical right shift on int32 via arithmetic shift + mask."""
    mask = jnp.int32((1 << (32 - k)) - 1)
    return jnp.bitwise_and(jnp.right_shift(x, k), mask)


def _mix32(x):
    """lowbias32 integer hash (int32 with two's-complement wraparound)."""
    x = jnp.bitwise_xor(x, _shr_logical(x, 16))
    x = x * jnp.int32(_M1)
    x = jnp.bitwise_xor(x, _shr_logical(x, 15))
    x = x * jnp.int32(_M2)
    x = jnp.bitwise_xor(x, _shr_logical(x, 16))
    return x


def _bits_to_unit_open(bits):
    """Map hashed bits to a float in the open interval (0, 1). 24-bit res."""
    u = jnp.bitwise_and(bits, jnp.int32(0x00FFFFFF)).astype(jnp.float32)
    return (u + 0.5) * _INV_2_24


def _ndtri(p):
    """Inverse standard-normal CDF (Acklam rational approx), single divide."""
    a1, a2, a3, a4, a5, a6 = (-3.969683028665376e+01, 2.209460984245205e+02,
                              -2.759285104469687e+02, 1.383577518672690e+02,
                              -3.066479806614716e+01, 2.506628277459239e+00)
    b1, b2, b3, b4, b5 = (-5.447609879822406e+01, 1.615858368580409e+02,
                          -1.556989798598866e+02, 6.680131188771972e+01,
                          -1.328068155288572e+01)
    c1, c2, c3, c4, c5, c6 = (-7.784894002430293e-03, -3.223964580411365e-01,
                              -2.400758277161838e+00, -2.549732539343734e+00,
                              4.374664141464968e+00, 2.938163982698783e+00)
    d1, d2, d3, d4 = (7.784695709041462e-03, 3.224671290700398e-01,
                      2.445134137142996e+00, 3.754408661907416e+00)
    # Central region.
    q = p - 0.5
    r = q * q
    num_c = (((((a1 * r + a2) * r + a3) * r + a4) * r + a5) * r + a6) * q
    den_c = ((((b1 * r + b2) * r + b3) * r + b4) * r + b5) * r + 1.0
    # Tails (by symmetry; both branches evaluated SIMD-style).
    pt = jnp.maximum(jnp.minimum(p, 1.0 - p), 1e-12)
    s = jnp.sqrt(-2.0 * jnp.log(pt))
    num_t = ((((c1 * s + c2) * s + c3) * s + c4) * s + c5) * s + c6
    den_t = (((d1 * s + d2) * s + d3) * s + d4) * s + 1.0
    num_t = jnp.where(q < 0.0, num_t, -num_t)   # lower tail < 0, upper > 0
    central = pt > 0.02425
    num = jnp.where(central, num_c, num_t)
    den = jnp.where(central, den_c, den_t)
    return num / den


def _normal_from(counter, seed):
    return _ndtri(_bits_to_unit_open(_mix32(jnp.bitwise_xor(counter, seed))))


def _uniform_from(counter, seed):
    return _bits_to_unit_open(_mix32(jnp.bitwise_xor(counter, seed)))


# ----------------------------------------------------------------------------
# Pallas kernel: one (batch item, row-tile) per grid step.
# ----------------------------------------------------------------------------
def _noisy_pair_kernel(seed_ref,           # SMEM (B, 4)  int32 per-field seeds
                       param_ref,          # SMEM (B, 16) f32 per-batch scalars
                       img_ref,            # VMEM (4, TH, W)
                       gt_ref,             # VMEM (4, TH, W) output
                       lq_ref,             # VMEM (4, TH, W) output
                       *, H, W, TH):
    b = pl.program_id(0)
    ht = pl.program_id(1)

    # Per-(batch, noise-field) seeds (SMEM scalars).
    read_seed = seed_ref[b, 0]
    row_seed = seed_ref[b, 1]
    quant_seed = seed_ref[b, 2]

    # Per-batch scalar parameters (SMEM) — divisions hoisted to the wrapper.
    read_sigma = param_ref[b, 8]
    row_sigma = param_ref[b, 9]

    # Global pixel counters for this row-tile (tiles get disjoint counters,
    # so the synthesized noise is independent of the tiling).
    r_idx = lax.broadcasted_iota(jnp.int32, (TH, W), 0)
    w_idx = lax.broadcasted_iota(jnp.int32, (TH, W), 1)
    gh = ht * TH + r_idx                    # global packed-row index
    pix = gh * W + w_idx                    # linear index within one plane

    # Row noise: one normal per (raw-row parity, global packed row),
    # constant along W.  Only 2*TH draws; channels (0,1) share the even-row
    # values, channels (2,3) share the odd-row values (matches _pack_bayer).
    r1 = lax.broadcasted_iota(jnp.int32, (TH, 1), 0) + ht * TH
    rn_even = _normal_from(r1, row_seed) * row_sigma        # (TH, 1)
    rn_odd = _normal_from(r1 + H, row_seed) * row_sigma     # (TH, 1)

    for c in range(4):                      # unrolled; each plane is (TH, W)
        sr = param_ref[b, c]                # scale / ratio  (to sensor domain)
        rs = param_ref[b, 4 + c]            # ratio / scale  (back to ISP)
        cb = param_ref[b, 10 + c]           # per-channel color bias

        img_c = img_ref[c]
        gt_c = jnp.clip(img_c, 0.0, 1.0)    # img_gt = clamp(img, 0, 1)
        gt_ref[c] = gt_c

        x = gt_c * sr                       # sensor-domain signal

        lin = pix + c * (H * W)
        read_n = _normal_from(lin, read_seed) * read_sigma   # Gaussian read
        quant_n = _uniform_from(lin, quant_seed) - 0.5       # quant, q = 1
        row_n = rn_even if c < 2 else rn_odd                 # (TH,1) bcast

        noisy = x + read_n + row_n + quant_n + cb
        lq_ref[c] = jnp.minimum(noisy * rs, 1.0)             # clamp(max=1)


def _pick_tile_rows(H, max_rows):
    """Largest divisor of H that is a multiple of 8 and <= max_rows."""
    if H % 8 != 0:
        return H                            # fall back to full-height block
    best = 8
    cap = min(H, max(8, int(max_rows)))
    for th in range(8, cap + 1, 8):
        if H % th == 0:
            best = th
    return best


def _noisy_pair_pallas(seeds, params, img, max_rows_per_tile=256):
    B, C, H, W = img.shape
    assert C == 4, "expected packed-Bayer 4-channel input"
    f32 = jnp.float32
    img = img.astype(f32)

    TH = _pick_tile_rows(H, max_rows_per_tile)
    nH = H // TH

    idx = lambda b, h, *prefetch: (b, 0, h, 0)
    blk = lambda: pl.BlockSpec((None, 4, TH, W), idx)

    grid_spec = pltpu.PrefetchScalarGridSpec(
        num_scalar_prefetch=2,              # seeds + packed scalar params
        grid=(B, nH),
        in_specs=[blk()],                   # only the image goes through VMEM
        out_specs=[blk(), blk()],
    )

    kernel = functools.partial(_noisy_pair_kernel, H=H, W=W, TH=TH)
    out_shape = (jax.ShapeDtypeStruct((B, 4, H, W), f32),
                 jax.ShapeDtypeStruct((B, 4, H, W), f32))

    return pl.pallas_call(
        kernel,
        out_shape=out_shape,
        grid_spec=grid_spec,
        compiler_params=pltpu.CompilerParams(
            dimension_semantics=("parallel", "parallel")),
    )(seeds, params, img)


# ----------------------------------------------------------------------------
# Module wrapper mirroring CalibratedNoisyPairGenerator.forward.
# ----------------------------------------------------------------------------
class CalibratedNoisyPairGeneratorPallas:
    def __init__(self, camera_params, noise_type="grqc"):
        self.camera_params = camera_params
        self.cameras = list(camera_params.keys())
        self.noise_type = noise_type.lower()
        self.read_type = ("TukeyLambda" if "t" in self.noise_type
                          else "Gaussian" if "g" in self.noise_type else None)

    def __call__(self, key, img, scale, ratio, vcam_id=None,
                 max_rows_per_tile=256):
        B = img.shape[0]
        kcam, kk, kread, krow, kseed = jax.random.split(key, 5)

        # sample_overall_system_gain
        idx = (int(jax.random.randint(kcam, (), 0, len(self.cameras)))
               if vcam_id is None else int(vcam_id))
        cam = self.cameras[idx]
        p = self.camera_params[cam]
        log_k_min, log_k_max = math.log(p["Kmin"]), math.log(p["Kmax"])
        log_K = jax.random.uniform(kk, (B,), jnp.float32,
                                   minval=log_k_min, maxval=log_k_max)
        K = jnp.exp(log_K)

        # sample_read_sigma (Gaussian read model)
        g = p[self.read_type]
        read_sigma = jnp.exp(jax.random.normal(kread, (B,)) * g["sigma"]
                             + log_K * g["slope"] + g["bias"])

        # sample_row_sigma
        r = p["Row"]
        row_sigma = jnp.exp(jax.random.normal(krow, (B,)) * r["sigma"]
                            + log_K * r["slope"] + r["bias"])

        # sample_color_bias
        cb_table = jnp.asarray(p["ColorBias"], jnp.float32)
        count = cb_table.shape[0]
        i_range = (p["Kmax"] - p["Kmin"]) / count
        cb_idx = jnp.clip(
            jnp.floor((K - p["Kmin"]) / i_range).astype(jnp.int32),
            0, count - 1)
        color_bias = cb_table[cb_idx]                       # (B, 4)

        scale2 = scale.reshape(B, 4).astype(jnp.float32)
        ratio2 = ratio.reshape(B, 1).astype(jnp.float32)

        # Pack per-batch scalars into one SMEM-resident table:
        #  [0:4] scale/ratio, [4:8] ratio/scale, [8] read sigma,
        #  [9] row sigma, [10:14] color bias, [14:16] unused.
        params = jnp.zeros((B, 16), jnp.float32)
        params = params.at[:, 0:4].set(scale2 / ratio2)
        params = params.at[:, 4:8].set(ratio2 / scale2)
        params = params.at[:, 8].set(read_sigma)
        params = params.at[:, 9].set(row_sigma)
        params = params.at[:, 10:14].set(color_bias)

        # Independent int32 stream seeds per (batch, noise field).
        seeds = jax.random.randint(kseed, (B, 4), 0, jnp.iinfo(jnp.int32).max,
                                   dtype=jnp.int32)

        img_gt, img_lq = _noisy_pair_pallas(seeds, params, img,
                                            max_rows_per_tile)

        info = {
            "cam": cam,
            "noise_params": {
                "isp_dgain": ratio, "scale": scale, "K": K,
                "read": read_sigma, "row": row_sigma,
                "color_bias": color_bias,
            },
        }
        return img_gt, img_lq, info


# ----------------------------------------------------------------------------
if __name__ == "__main__":
    key = jax.random.PRNGKey(0)
    k_img, k_scale, k_ratio, k_fwd = jax.random.split(key, 4)

    B, C, H, W = 2, 4, 16, 128
    img = jax.random.uniform(k_img, (B, C, H, W), jnp.float32)
    scale = jax.random.uniform(k_scale, (B, 4), jnp.float32,
                               minval=200.0, maxval=1000.0)
    ratio = jax.random.uniform(k_ratio, (B,), jnp.float32,
                               minval=1.0, maxval=100.0)

    gen = CalibratedNoisyPairGeneratorPallas(CAMERA_PARAMS, noise_type="grqc")
    # max_rows_per_tile=8 -> two row-tiles per image, exercising the H grid.
    img_gt, img_lq, info = gen(k_fwd, img, scale, ratio, max_rows_per_tile=8)
    jax.block_until_ready((img_gt, img_lq))

    assert img_gt.shape == (B, C, H, W) and img_gt.dtype == jnp.float32
    assert img_lq.shape == (B, C, H, W) and img_lq.dtype == jnp.float32
    assert bool(jnp.all(jnp.isfinite(img_lq)))
    assert bool(jnp.all(img_gt >= 0.0)) and bool(jnp.all(img_gt <= 1.0))
    assert bool(jnp.all(img_lq <= 1.0))
    print("KERNEL_OK")
</pallas_src>

<mosaic_0001>
module attributes {stable_mosaic.version = 11 : i64} {
  func.func @_noisy_pair_kernel(%arg0: i32, %arg1: i32, %arg2: memref<2x4xi32, #tpu.memory_space<smem>>, %arg3: memref<2x16xf32, #tpu.memory_space<smem>>, %arg4: memref<1x4x8x128xf32, #tpu.memory_space<vmem>>, %arg5: memref<1x4x8x128xf32, #tpu.memory_space<vmem>>, %arg6: memref<1x4x8x128xf32, #tpu.memory_space<vmem>>) attributes {dimension_semantics = [#tpu.dimension_semantics<parallel>, #tpu.dimension_semantics<parallel>], iteration_bounds = array<i64: 2, 2>, scalar_prefetch = 2 : i64, scratch_operands = 0 : i64, tpu.core_type = #tpu.core_type<tc>, window_params = [{transform_indices = @transform_0, window_bounds = array<i64: 1, 4, 8, 128>}, {transform_indices = @transform_1, window_bounds = array<i64: 1, 4, 8, 128>}, {transform_indices = @transform_2, window_bounds = array<i64: 1, 4, 8, 128>}]} {
    %0 = arith.index_cast %arg0 : i32 to index
    %c0 = arith.constant 0 : index
    %1 = memref.load %arg2[%0, %c0] : memref<2x4xi32, #tpu.memory_space<smem>>
    %2 = arith.index_cast %arg0 : i32 to index
    %c1 = arith.constant 1 : index
    %3 = memref.load %arg2[%2, %c1] : memref<2x4xi32, #tpu.memory_space<smem>>
    %4 = arith.index_cast %arg0 : i32 to index
    %c2 = arith.constant 2 : index
    %5 = memref.load %arg2[%4, %c2] : memref<2x4xi32, #tpu.memory_space<smem>>
    %6 = arith.index_cast %arg0 : i32 to index
    %c8 = arith.constant 8 : index
    %7 = memref.load %arg3[%6, %c8] : memref<2x16xf32, #tpu.memory_space<smem>>
    %8 = arith.index_cast %arg0 : i32 to index
    %c9 = arith.constant 9 : index
    %9 = memref.load %arg3[%8, %c9] : memref<2x16xf32, #tpu.memory_space<smem>>
    %10 = tpu.iota {dimensions = array<i32: 0>} : vector<8x128xi32>
    %11 = tpu.iota {dimensions = array<i32: 1>} : vector<8x128xi32>
    %c8_i32 = arith.constant 8 : i32
    %12 = arith.muli %arg1, %c8_i32 : i32
    %13 = vector.broadcast %12 : i32 to vector<8x128xi32>
    %14 = arith.addi %13, %10 : vector<8x128xi32>
    %c128_i32 = arith.constant 128 : i32
    %15 = vector.broadcast %c128_i32 : i32 to vector<8x128xi32>
    %16 = arith.muli %14, %15 : vector<8x128xi32>
    %17 = arith.addi %16, %11 : vector<8x128xi32>
    %18 = tpu.iota {dimensions = array<i32: 0>} : vector<8x1xi32>
    %c8_i32_0 = arith.constant 8 : i32
    %19 = arith.muli %arg1, %c8_i32_0 : i32
    %20 = vector.broadcast %19 : i32 to vector<8x1xi32>
    %21 = arith.addi %18, %20 : vector<8x1xi32>
    %22 = vector.broadcast %3 : i32 to vector<8x1xi32>
    %23 = arith.xori %21, %22 : vector<8x1xi32>
    %c16_i32 = arith.constant 16 : i32
    %24 = vector.broadcast %c16_i32 : i32 to vector<8x1xi32>
    %25 = arith.shrsi %23, %24 : vector<8x1xi32>
    %c65535_i32 = arith.constant 65535 : i32
    %26 = vector.broadcast %c65535_i32 : i32 to vector<8x1xi32>
    %27 = arith.andi %25, %26 : vector<8x1xi32>
    %28 = arith.xori %23, %27 : vector<8x1xi32>
    %c2146121005_i32 = arith.constant 2146121005 : i32
    %29 = vector.broadcast %c2146121005_i32 : i32 to vector<8x1xi32>
    %30 = arith.muli %28, %29 : vector<8x1xi32>
    %c15_i32 = arith.constant 15 : i32
    %31 = vector.broadcast %c15_i32 : i32 to vector<8x1xi32>
    %32 = arith.shrsi %30, %31 : vector<8x1xi32>
    %c131071_i32 = arith.constant 131071 : i32
    %33 = vector.broadcast %c131071_i32 : i32 to vector<8x1xi32>
    %34 = arith.andi %32, %33 : vector<8x1xi32>
    %35 = arith.xori %30, %34 : vector<8x1xi32>
    %c-2073254261_i32 = arith.constant -2073254261 : i32
    %36 = vector.broadcast %c-2073254261_i32 : i32 to vector<8x1xi32>
    %37 = arith.muli %35, %36 : vector<8x1xi32>
    %c16_i32_1 = arith.constant 16 : i32
    %38 = vector.broadcast %c16_i32_1 : i32 to vector<8x1xi32>
    %39 = arith.shrsi %37, %38 : vector<8x1xi32>
    %c65535_i32_2 = arith.constant 65535 : i32
    %40 = vector.broadcast %c65535_i32_2 : i32 to vector<8x1xi32>
    %41 = arith.andi %39, %40 : vector<8x1xi32>
    %42 = arith.xori %37, %41 : vector<8x1xi32>
    %c16777215_i32 = arith.constant 16777215 : i32
    %43 = vector.broadcast %c16777215_i32 : i32 to vector<8x1xi32>
    %44 = arith.andi %42, %43 : vector<8x1xi32>
    %45 = arith.sitofp %44 : vector<8x1xi32> to vector<8x1xf32>
    %cst = arith.constant 5.000000e-01 : f32
    %46 = vector.broadcast %cst : f32 to vector<8x1xf32>
    %47 = arith.addf %45, %46 : vector<8x1xf32>
    %cst_3 = arith.constant 5.96046448E-8 : f32
    %48 = vector.broadcast %cst_3 : f32 to vector<8x1xf32>
    %49 = arith.mulf %47, %48 : vector<8x1xf32>
    %cst_4 = arith.constant 5.000000e-01 : f32
    %50 = vector.broadcast %cst_4 : f32 to vector<8x1xf32>
    %51 = arith.subf %49, %50 : vector<8x1xf32>
    %52 = arith.mulf %51, %51 : vector<8x1xf32>
    %cst_5 = arith.constant -39.6968307 : f32
    %53 = vector.broadcast %cst_5 : f32 to vector<8x1xf32>
    %54 = arith.mulf %53, %52 : vector<8x1xf32>
    %cst_6 = arith.constant 220.946106 : f32
    %55 = vector.broadcast %cst_6 : f32 to vector<8x1xf32>
    %56 = arith.addf %54, %55 : vector<8x1xf32>
    %57 = arith.mulf %56, %52 : vector<8x1xf32>
    %cst_7 = arith.constant -275.928497 : f32
    %58 = vector.broadcast %cst_7 : f32 to vector<8x1xf32>
    %59 = arith.addf %57, %58 : vector<8x1xf32>
    %60 = arith.mulf %59, %52 : vector<8x1xf32>
    %cst_8 = arith.constant 138.357758 : f32
    %61 = vector.broadcast %cst_8 : f32 to vector<8x1xf32>
    %62 = arith.addf %60, %61 : vector<8x1xf32>
    %63 = arith.mulf %62, %52 : vector<8x1xf32>
    %cst_9 = arith.constant -30.6647987 : f32
    %64 = vector.broadcast %cst_9 : f32 to vector<8x1xf32>
    %65 = arith.addf %63, %64 : vector<8x1xf32>
    %66 = arith.mulf %65, %52 : vector<8x1xf32>
    %cst_10 = arith.constant 2.50662827 : f32
    %67 = vector.broadcast %cst_10 : f32 to vector<8x1xf32>
    %68 = arith.addf %66, %67 : vector<8x1xf32>
    %69 = arith.mulf %68, %51 : vector<8x1xf32>
    %cst_11 = arith.constant -54.4760971 : f32
    %70 = vector.broadcast %cst_11 : f32 to vector<8x1xf32>
    %71 = arith.mulf %70, %52 : vector<8x1xf32>
    %cst_12 = arith.constant 161.585831 : f32
    %72 = vector.broadcast %cst_12 : f32 to vector<8x1xf32>
    %73 = arith.addf %71, %72 : vector<8x1xf32>
    %74 = arith.mulf %73, %52 : vector<8x1xf32>
    %cst_13 = arith.constant -155.698975 : f32
    %75 = vector.broadcast %cst_13 : f32 to vector<8x1xf32>
    %76 = arith.addf %74, %75 : vector<8x1xf32>
    %77 = arith.mulf %76, %52 : vector<8x1xf32>
    %cst_14 = arith.constant 66.8013153 : f32
    %78 = vector.broadcast %cst_14 : f32 to vector<8x1xf32>
    %79 = arith.addf %77, %78 : vector<8x1xf32>
    %80 = arith.mulf %79, %52 : vector<8x1xf32>
    %cst_15 = arith.constant -13.2806816 : f32
    %81 = vector.broadcast %cst_15 : f32 to vector<8x1xf32>
    %82 = arith.addf %80, %81 : vector<8x1xf32>
    %83 = arith.mulf %82, %52 : vector<8x1xf32>
    %cst_16 = arith.constant 1.000000e+00 : f32
    %84 = vector.broadcast %cst_16 : f32 to vector<8x1xf32>
    %85 = arith.addf %83, %84 : vector<8x1xf32>
    %cst_17 = arith.constant 1.000000e+00 : f32
    %86 = vector.broadcast %cst_17 : f32 to vector<8x1xf32>
    %87 = arith.subf %86, %49 : vector<8x1xf32>
    %88 = arith.minimumf %49, %87 : vector<8x1xf32>
    %cst_18 = arith.constant 9.99999996E-13 : f32
    %89 = vector.broadcast %cst_18 : f32 to vector<8x1xf32>
    %90 = arith.maximumf %88, %89 : vector<8x1xf32>
    %91 = math.log %90 : vector<8x1xf32>
    %cst_19 = arith.constant -2.000000e+00 : f32
    %92 = vector.broadcast %cst_19 : f32 to vector<8x1xf32>
    %93 = arith.mulf %92, %91 : vector<8x1xf32>
    %94 = math.sqrt %93 : vector<8x1xf32>
    %cst_20 = arith.constant -0.0077848942 : f32
    %95 = vector.broadcast %cst_20 : f32 to vector<8x1xf32>
    %96 = arith.mulf %95, %94 : vector<8x1xf32>
    %cst_21 = arith.constant -0.322396457 : f32
    %97 = vector.broadcast %cst_21 : f32 to vector<8x1xf32>
    %98 = arith.addf %96, %97 : vector<8x1xf32>
    %99 = arith.mulf %98, %94 : vector<8x1xf32>
    %cst_22 = arith.constant -2.40075827 : f32
    %100 = vector.broadcast %cst_22 : f32 to vector<8x1xf32>
    %101 = arith.addf %99, %100 : vector<8x1xf32>
    %102 = arith.mulf %101, %94 : vector<8x1xf32>
    %cst_23 = arith.constant -2.54973245 : f32
    %103 = vector.broadcast %cst_23 : f32 to vector<8x1xf32>
    %104 = arith.addf %102, %103 : vector<8x1xf32>
    %105 = arith.mulf %104, %94 : vector<8x1xf32>
    %cst_24 = arith.constant 4.37466431 : f32
    %106 = vector.broadcast %cst_24 : f32 to vector<8x1xf32>
    %107 = arith.addf %105, %106 : vector<8x1xf32>
    %108 = arith.mulf %107, %94 : vector<8x1xf32>
    %cst_25 = arith.constant 2.938164 : f32
    %109 = vector.broadcast %cst_25 : f32 to vector<8x1xf32>
    %110 = arith.addf %108, %109 : vector<8x1xf32>
    %cst_26 = arith.constant 0.00778469583 : f32
    %111 = vector.broadcast %cst_26 : f32 to vector<8x1xf32>
    %112 = arith.mulf %111, %94 : vector<8x1xf32>
    %cst_27 = arith.constant 0.322467119 : f32
    %113 = vector.broadcast %cst_27 : f32 to vector<8x1xf32>
    %114 = arith.addf %112, %113 : vector<8x1xf32>
    %115 = arith.mulf %114, %94 : vector<8x1xf32>
    %cst_28 = arith.constant 2.44513416 : f32
    %116 = vector.broadcast %cst_28 : f32 to vector<8x1xf32>
    %117 = arith.addf %115, %116 : vector<8x1xf32>
    %118 = arith.mulf %117, %94 : vector<8x1xf32>
    %cst_29 = arith.constant 3.7544086 : f32
    %119 = vector.broadcast %cst_29 : f32 to vector<8x1xf32>
    %120 = arith.addf %118, %119 : vector<8x1xf32>
    %121 = arith.mulf %120, %94 : vector<8x1xf32>
    %cst_30 = arith.constant 1.000000e+00 : f32
    %122 = vector.broadcast %cst_30 : f32 to vector<8x1xf32>
    %123 = arith.addf %121, %122 : vector<8x1xf32>
    %cst_31 = arith.constant 0.000000e+00 : f32
    %124 = vector.broadcast %cst_31 : f32 to vector<8x1xf32>
    %125 = arith.cmpf olt, %51, %124 : vector<8x1xf32>
    %cst_32 = arith.constant 0.000000e+00 : f32
    %126 = vector.broadcast %cst_32 : f32 to vector<8x1xf32>
    %127 = arith.subf %126, %110 : vector<8x1xf32>
    %128 = arith.select %125, %110, %127 : vector<8x1xi1>, vector<8x1xf32>
    %cst_33 = arith.constant 2.425000e-02 : f32
    %129 = vector.broadcast %cst_33 : f32 to vector<8x1xf32>
    %130 = arith.cmpf ogt, %90, %129 : vector<8x1xf32>
    %131 = arith.select %130, %69, %128 : vector<8x1xi1>, vector<8x1xf32>
    %132 = arith.select %130, %85, %123 : vector<8x1xi1>, vector<8x1xf32>
    %133 = arith.divf %131, %132 : vector<8x1xf32>
    %134 = vector.broadcast %9 : f32 to vector<8x1xf32>
    %135 = arith.mulf %133, %134 : vector<8x1xf32>
    %c16_i32_34 = arith.constant 16 : i32
    %136 = vector.broadcast %c16_i32_34 : i32 to vector<8x1xi32>
    %137 = arith.addi %21, %136 : vector<8x1xi32>
    %138 = vector.broadcast %3 : i32 to vector<8x1xi32>
    %139 = arith.xori %137, %138 : vector<8x1xi32>
    %c16_i32_35 = arith.constant 16 : i32
    %140 = vector.broadcast %c16_i32_35 : i32 to vector<8x1xi32>
    %141 = arith.shrsi %139, %140 : vector<8x1xi32>
    %c65535_i32_36 = arith.constant 65535 : i32
    %142 = vector.broadcast %c65535_i32_36 : i32 to vector<8x1xi32>
    %143 = arith.andi %141, %142 : vector<8x1xi32>
    %144 = arith.xori %139, %143 : vector<8x1xi32>
    %c2146121005_i32_37 = arith.constant 2146121005 : i32
    %145 = vector.broadcast %c2146121005_i32_37 : i32 to vector<8x1xi32>
    %146 = arith.muli %144, %145 : vector<8x1xi32>
    %c15_i32_38 = arith.constant 15 : i32
    %147 = vector.broadcast %c15_i32_38 : i32 to vector<8x1xi32>
    %148 = arith.shrsi %146, %147 : vector<8x1xi32>
    %c131071_i32_39 = arith.constant 131071 : i32
    %149 = vector.broadcast %c131071_i32_39 : i32 to vector<8x1xi32>
    %150 = arith.andi %148, %149 : vector<8x1xi32>
    %151 = arith.xori %146, %150 : vector<8x1xi32>
    %c-2073254261_i32_40 = arith.constant -2073254261 : i32
    %152 = vector.broadcast %c-2073254261_i32_40 : i32 to vector<8x1xi32>
    %153 = arith.muli %151, %152 : vector<8x1xi32>
    %c16_i32_41 = arith.constant 16 : i32
    %154 = vector.broadcast %c16_i32_41 : i32 to vector<8x1xi32>
    %155 = arith.shrsi %153, %154 : vector<8x1xi32>
    %c65535_i32_42 = arith.constant 65535 : i32
    %156 = vector.broadcast %c65535_i32_42 : i32 to vector<8x1xi32>
    %157 = arith.andi %155, %156 : vector<8x1xi32>
    %158 = arith.xori %153, %157 : vector<8x1xi32>
    %c16777215_i32_43 = arith.constant 16777215 : i32
    %159 = vector.broadcast %c16777215_i32_43 : i32 to vector<8x1xi32>
    %160 = arith.andi %158, %159 : vector<8x1xi32>
    %161 = arith.sitofp %160 : vector<8x1xi32> to vector<8x1xf32>
    %cst_44 = arith.constant 5.000000e-01 : f32
    %162 = vector.broadcast %cst_44 : f32 to vector<8x1xf32>
    %163 = arith.addf %161, %162 : vector<8x1xf32>
    %cst_45 = arith.constant 5.96046448E-8 : f32
    %164 = vector.broadcast %cst_45 : f32 to vector<8x1xf32>
    %165 = arith.mulf %163, %164 : vector<8x1xf32>
    %cst_46 = arith.constant 5.000000e-01 : f32
    %166 = vector.broadcast %cst_46 : f32 to vector<8x1xf32>
    %167 = arith.subf %165, %166 : vector<8x1xf32>
    %168 = arith.mulf %167, %167 : vector<8x1xf32>
    %cst_47 = arith.constant -39.6968307 : f32
    %169 = vector.broadcast %cst_47 : f32 to vector<8x1xf32>
    %170 = arith.mulf %169, %168 : vector<8x1xf32>
    %cst_48 = arith.constant 220.946106 : f32
    %171 = vector.broadcast %cst_48 : f32 to vector<8x1xf32>
    %172 = arith.addf %170, %171 : vector<8x1xf32>
    %173 = arith.mulf %172, %168 : vector<8x1xf32>
    %cst_49 = arith.constant -275.928497 : f32
    %174 = vector.broadcast %cst_49 : f32 to vector<8x1xf32>
    %175 = arith.addf %173, %174 : vector<8x1xf32>
    %176 = arith.mulf %175, %168 : vector<8x1xf32>
    %cst_50 = arith.constant 138.357758 : f32
    %177 = vector.broadcast %cst_50 : f32 to vector<8x1xf32>
    %178 = arith.addf %176, %177 : vector<8x1xf32>
    %179 = arith.mulf %178, %168 : vector<8x1xf32>
    %cst_51 = arith.constant -30.6647987 : f32
    %180 = vector.broadcast %cst_51 : f32 to vector<8x1xf32>
    %181 = arith.addf %179, %180 : vector<8x1xf32>
    %182 = arith.mulf %181, %168 : vector<8x1xf32>
    %cst_52 = arith.constant 2.50662827 : f32
    %183 = vector.broadcast %cst_52 : f32 to vector<8x1xf32>
    %184 = arith.addf %182, %183 : vector<8x1xf32>
    %185 = arith.mulf %184, %167 : vector<8x1xf32>
    %cst_53 = arith.constant -54.4760971 : f32
    %186 = vector.broadcast %cst_53 : f32 to vector<8x1xf32>
    %187 = arith.mulf %186, %168 : vector<8x1xf32>
    %cst_54 = arith.constant 161.585831 : f32
    %188 = vector.broadcast %cst_54 : f32 to vector<8x1xf32>
    %189 = arith.addf %187, %188 : vector<8x1xf32>
    %190 = arith.mulf %189, %168 : vector<8x1xf32>
    %cst_55 = arith.constant -155.698975 : f32
    %191 = vector.broadcast %cst_55 : f32 to vector<8x1xf32>
    %192 = arith.addf %190, %191 : vector<8x1xf32>
    %193 = arith.mulf %192, %168 : vector<8x1xf32>
    %cst_56 = arith.constant 66.8013153 : f32
    %194 = vector.broadcast %cst_56 : f32 to vector<8x1xf32>
    %195 = arith.addf %193, %194 : vector<8x1xf32>
    %196 = arith.mulf %195, %168 : vector<8x1xf32>
    %cst_57 = arith.constant -13.2806816 : f32
    %197 = vector.broadcast %cst_57 : f32 to vector<8x1xf32>
    %198 = arith.addf %196, %197 : vector<8x1xf32>
    %199 = arith.mulf %198, %168 : vector<8x1xf32>
    %cst_58 = arith.constant 1.000000e+00 : f32
    %200 = vector.broadcast %cst_58 : f32 to vector<8x1xf32>
    %201 = arith.addf %199, %200 : vector<8x1xf32>
    %cst_59 = arith.constant 1.000000e+00 : f32
    %202 = vector.broadcast %cst_59 : f32 to vector<8x1xf32>
    %203 = arith.subf %202, %165 : vector<8x1xf32>
    %204 = arith.minimumf %165, %203 : vector<8x1xf32>
    %cst_60 = arith.constant 9.99999996E-13 : f32
    %205 = vector.broadcast %cst_60 : f32 to vector<8x1xf32>
    %206 = arith.maximumf %204, %205 : vector<8x1xf32>
    %207 = math.log %206 : vector<8x1xf32>
    %cst_61 = arith.constant -2.000000e+00 : f32
    %208 = vector.broadcast %cst_61 : f32 to vector<8x1xf32>
    %209 = arith.mulf %208, %207 : vector<8x1xf32>
    %210 = math.sqrt %209 : vector<8x1xf32>
    %cst_62 = arith.constant -0.0077848942 : f32
    %211 = vector.broadcast %cst_62 : f32 to vector<8x1xf32>
    %212 = arith.mulf %211, %210 : vector<8x1xf32>
    %cst_63 = arith.constant -0.322396457 : f32
    %213 = vector.broadcast %cst_63 : f32 to vector<8x1xf32>
    %214 = arith.addf %212, %213 : vector<8x1xf32>
    %215 = arith.mulf %214, %210 : vector<8x1xf32>
    %cst_64 = arith.constant -2.40075827 : f32
    %216 = vector.broadcast %cst_64 : f32 to vector<8x1xf32>
    %217 = arith.addf %215, %216 : vector<8x1xf32>
    %218 = arith.mulf %217, %210 : vector<8x1xf32>
    %cst_65 = arith.constant -2.54973245 : f32
    %219 = vector.broadcast %cst_65 : f32 to vector<8x1xf32>
    %220 = arith.addf %218, %219 : vector<8x1xf32>
    %221 = arith.mulf %220, %210 : vector<8x1xf32>
    %cst_66 = arith.constant 4.37466431 : f32
    %222 = vector.broadcast %cst_66 : f32 to vector<8x1xf32>
    %223 = arith.addf %221, %222 : vector<8x1xf32>
    %224 = arith.mulf %223, %210 : vector<8x1xf32>
    %cst_67 = arith.constant 2.938164 : f32
    %225 = vector.broadcast %cst_67 : f32 to vector<8x1xf32>
    %226 = arith.addf %224, %225 : vector<8x1xf32>
    %cst_68 = arith.constant 0.00778469583 : f32
    %227 = vector.broadcast %cst_68 : f32 to vector<8x1xf32>
    %228 = arith.mulf %227, %210 : vector<8x1xf32>
    %cst_69 = arith.constant 0.322467119 : f32
    %229 = vector.broadcast %cst_69 : f32 to vector<8x1xf32>
    %230 = arith.addf %228, %229 : vector<8x1xf32>
    %231 = arith.mulf %230, %210 : vector<8x1xf32>
    %cst_70 = arith.constant 2.44513416 : f32
    %232 = vector.broadcast %cst_70 : f32 to vector<8x1xf32>
    %233 = arith.addf %231, %232 : vector<8x1xf32>
    %234 = arith.mulf %233, %210 : vector<8x1xf32>
    %cst_71 = arith.constant 3.7544086 : f32
    %235 = vector.broadcast %cst_71 : f32 to vector<8x1xf32>
    %236 = arith.addf %234, %235 : vector<8x1xf32>
    %237 = arith.mulf %236, %210 : vector<8x1xf32>
    %cst_72 = arith.constant 1.000000e+00 : f32
    %238 = vector.broadcast %cst_72 : f32 to vector<8x1xf32>
    %239 = arith.addf %237, %238 : vector<8x1xf32>
    %cst_73 = arith.constant 0.000000e+00 : f32
    %240 = vector.broadcast %cst_73 : f32 to vector<8x1xf32>
    %241 = arith.cmpf olt, %167, %240 : vector<8x1xf32>
    %cst_74 = arith.constant 0.000000e+00 : f32
    %242 = vector.broadcast %cst_74 : f32 to vector<8x1xf32>
    %243 = arith.subf %242, %226 : vector<8x1xf32>
    %244 = arith.select %241, %226, %243 : vector<8x1xi1>, vector<8x1xf32>
    %cst_75 = arith.constant 2.425000e-02 : f32
    %245 = vector.broadcast %cst_75 : f32 to vector<8x1xf32>
    %246 = arith.cmpf ogt, %206, %245 : vector<8x1xf32>
    %247 = arith.select %246, %185, %244 : vector<8x1xi1>, vector<8x1xf32>
    %248 = arith.select %246, %201, %239 : vector<8x1xi1>, vector<8x1xf32>
    %249 = arith.divf %247, %248 : vector<8x1xf32>
    %250 = vector.broadcast %9 : f32 to vector<8x1xf32>
    %251 = arith.mulf %249, %250 : vector<8x1xf32>
    %252 = arith.index_cast %arg0 : i32 to index
    %c0_76 = arith.constant 0 : index
    %253 = memref.load %arg3[%252, %c0_76] : memref<2x16xf32, #tpu.memory_space<smem>>
    %254 = arith.index_cast %arg0 : i32 to index
    %c4 = arith.constant 4 : index
    %255 = memref.load %arg3[%254, %c4] : memref<2x16xf32, #tpu.memory_space<smem>>
    %256 = arith.index_cast %arg0 : i32 to index
    %c10 = arith.constant 10 : index
    %257 = memref.load %arg3[%256, %c10] : memref<2x16xf32, #tpu.memory_space<smem>>
    %c0_77 = arith.constant 0 : index
    %c0_78 = arith.constant 0 : index
    %c0_79 = arith.constant 0 : index
    %c0_80 = arith.constant 0 : index
    %258 = vector.load %arg4[%c0_77, %c0_78, %c0_79, %c0_80] : memref<1x4x8x128xf32, #tpu.memory_space<vmem>>, vector<1x1x8x128xf32>
    %259 = vector.shape_cast %258 : vector<1x1x8x128xf32> to vector<8x128xf32>
    %cst_81 = arith.constant 0.000000e+00 : f32
    %cst_82 = arith.constant 1.000000e+00 : f32
    %260 = vector.broadcast %cst_81 : f32 to vector<8x128xf32>
    %261 = arith.maximumf %260, %259 : vector<8x128xf32>
    %262 = vector.broadcast %cst_82 : f32 to vector<8x128xf32>
    %263 = arith.minimumf %262, %261 : vector<8x128xf32>
    %c0_83 = arith.constant 0 : index
    %c0_84 = arith.constant 0 : index
    %c0_85 = arith.constant 0 : index
    %c0_86 = arith.constant 0 : index
    %264 = vector.load %arg5[%c0_83, %c0_84, %c0_85, %c0_86] : memref<1x4x8x128xf32, #tpu.memory_space<vmem>>, vector<1x1x8x128xf32>
    %265 = vector.shape_cast %264 : vector<1x1x8x128xf32> to vector<8x128xf32>
    %266 = vector.shape_cast %263 : vector<8x128xf32> to vector<1x1x8x128xf32>
    tpu.vector_store %arg5[%c0_83, %c0_84, %c0_85, %c0_86], %266 {strides = array<i32>} : memref<1x4x8x128xf32, #tpu.memory_space<vmem>>, vector<1x1x8x128xf32>,
    %267 = vector.broadcast %253 : f32 to vector<8x128xf32>
    %268 = arith.mulf %263, %267 : vector<8x128xf32>
    %c0_i32 = arith.constant 0 : i32
    %269 = vector.broadcast %c0_i32 : i32 to vector<8x128xi32>
    %270 = arith.addi %17, %269 : vector<8x128xi32>
    %271 = vector.broadcast %1 : i32 to vector<8x128xi32>
    %272 = arith.xori %270, %271 : vector<8x128xi32>
    %c16_i32_87 = arith.constant 16 : i32
    %273 = vector.broadcast %c16_i32_87 : i32 to vector<8x128xi32>
    %274 = arith.shrsi %272, %273 : vector<8x128xi32>
    %c65535_i32_88 = arith.constant 65535 : i32
    %275 = vector.broadcast %c65535_i32_88 : i32 to vector<8x128xi32>
    %276 = arith.andi %274, %275 : vector<8x128xi32>
    %277 = arith.xori %272, %276 : vector<8x128xi32>
    %c2146121005_i32_89 = arith.constant 2146121005 : i32
    %278 = vector.broadcast %c2146121005_i32_89 : i32 to vector<8x128xi32>
    %279 = arith.muli %277, %278 : vector<8x128xi32>
    %c15_i32_90 = arith.constant 15 : i32
    %280 = vector.broadcast %c15_i32_90 : i32 to vector<8x128xi32>
    %281 = arith.shrsi %279, %280 : vector<8x128xi32>
    %c131071_i32_91 = arith.constant 131071 : i32
    %282 = vector.broadcast %c131071_i32_91 : i32 to vector<8x128xi32>
    %283 = arith.andi %281, %282 : vector<8x128xi32>
    %284 = arith.xori %279, %283 : vector<8x128xi32>
    %c-2073254261_i32_92 = arith.constant -2073254261 : i32
    %285 = vector.broadcast %c-2073254261_i32_92 : i32 to vector<8x128xi32>
    %286 = arith.muli %284, %285 : vector<8x128xi32>
    %c16_i32_93 = arith.constant 16 : i32
    %287 = vector.broadcast %c16_i32_93 : i32 to vector<8x128xi32>
    %288 = arith.shrsi %286, %287 : vector<8x128xi32>
    %c65535_i32_94 = arith.constant 65535 : i32
    %289 = vector.broadcast %c65535_i32_94 : i32 to vector<8x128xi32>
    %290 = arith.andi %288, %289 : vector<8x128xi32>
    %291 = arith.xori %286, %290 : vector<8x128xi32>
    %c16777215_i32_95 = arith.constant 16777215 : i32
    %292 = vector.broadcast %c16777215_i32_95 : i32 to vector<8x128xi32>
    %293 = arith.andi %291, %292 : vector<8x128xi32>
    %294 = arith.sitofp %293 : vector<8x128xi32> to vector<8x128xf32>
    %cst_96 = arith.constant 5.000000e-01 : f32
    %295 = vector.broadcast %cst_96 : f32 to vector<8x128xf32>
    %296 = arith.addf %294, %295 : vector<8x128xf32>
    %cst_97 = arith.constant 5.96046448E-8 : f32
    %297 = vector.broadcast %cst_97 : f32 to vector<8x128xf32>
    %298 = arith.mulf %296, %297 : vector<8x128xf32>
    %cst_98 = arith.constant 5.000000e-01 : f32
    %299 = vector.broadcast %cst_98 : f32 to vector<8x128xf32>
    %300 = arith.subf %298, %299 : vector<8x128xf32>
    %301 = arith.mulf %300, %300 : vector<8x128xf32>
    %cst_99 = arith.constant -39.6968307 : f32
    %302 = vector.broadcast %cst_99 : f32 to vector<8x128xf32>
    %303 = arith.mulf %302, %301 : vector<8x128xf32>
    %cst_100 = arith.constant 220.946106 : f32
    %304 = vector.broadcast %cst_100 : f32 to vector<8x128xf32>
    %305 = arith.addf %303, %304 : vector<8x128xf32>
    %306 = arith.mulf %305, %301 : vector<8x128xf32>
    %cst_101 = arith.constant -275.928497 : f32
    %307 = vector.broadcast %cst_101 : f32 to vector<8x128xf32>
    %308 = arith.addf %306, %307 : vector<8x128xf32>
    %309 = arith.mulf %308, %301 : vector<8x128xf32>
    %cst_102 = arith.constant 138.357758 : f32
    %310 = vector.broadcast %cst_102 : f32 to vector<8x128xf32>
    %311 = arith.addf %309, %310 : vector<8x128xf32>
    %312 = arith.mulf %311, %301 : vector<8x128xf32>
    %cst_103 = arith.constant -30.6647987 : f32
    %313 = vector.broadcast %cst_103 : f32 to vector<8x128xf32>
    %314 = arith.addf %312, %313 : vector<8x128xf32>
    %315 = arith.mulf %314, %301 : vector<8x128xf32>
    %cst_104 = arith.constant 2.50662827 : f32
    %316 = vector.broadcast %cst_104 : f32 to vector<8x128xf32>
    %317 = arith.addf %315, %316 : vector<8x128xf32>
    %318 = arith.mulf %317, %300 : vector<8x128xf32>
    %cst_105 = arith.constant -54.4760971 : f32
    %319 = vector.broadcast %cst_105 : f32 to vector<8x128xf32>
    %320 = arith.mulf %319, %301 : vector<8x128xf32>
    %cst_106 = arith.constant 161.585831 : f32
    %321 = vector.broadcast %cst_106 : f32 to vector<8x128xf32>
    %322 = arith.addf %320, %321 : vector<8x128xf32>
    %323 = arith.mulf %322, %301 : vector<8x128xf32>
    %cst_107 = arith.constant -155.698975 : f32
    %324 = vector.broadcast %cst_107 : f32 to vector<8x128xf32>
    %325 = arith.addf %323, %324 : vector<8x128xf32>
    %326 = arith.mulf %325, %301 : vector<8x128xf32>
    %cst_108 = arith.constant 66.8013153 : f32
    %327 = vector.broadcast %cst_108 : f32 to vector<8x128xf32>
    %328 = arith.addf %326, %327 : vector<8x128xf32>
    %329 = arith.mulf %328, %301 : vector<8x128xf32>
    %cst_109 = arith.constant -13.2806816 : f32
    %330 = vector.broadcast %cst_109 : f32 to vector<8x128xf32>
    %331 = arith.addf %329, %330 : vector<8x128xf32>
    %332 = arith.mulf %331, %301 : vector<8x128xf32>
    %cst_110 = arith.constant 1.000000e+00 : f32
    %333 = vector.broadcast %cst_110 : f32 to vector<8x128xf32>
    %334 = arith.addf %332, %333 : vector<8x128xf32>
    %cst_111 = arith.constant 1.000000e+00 : f32
    %335 = vector.broadcast %cst_111 : f32 to vector<8x128xf32>
    %336 = arith.subf %335, %298 : vector<8x128xf32>
    %337 = arith.minimumf %298, %336 : vector<8x128xf32>
    %cst_112 = arith.constant 9.99999996E-13 : f32
    %338 = vector.broadcast %cst_112 : f32 to vector<8x128xf32>
    %339 = arith.maximumf %337, %338 : vector<8x128xf32>
    %340 = math.log %339 : vector<8x128xf32>
    %cst_113 = arith.constant -2.000000e+00 : f32
    %341 = vector.broadcast %cst_113 : f32 to vector<8x128xf32>
    %342 = arith.mulf %341, %340 : vector<8x128xf32>
    %343 = math.sqrt %342 : vector<8x128xf32>
    %cst_114 = arith.constant -0.0077848942 : f32
    %344 = vector.broadcast %cst_114 : f32 to vector<8x128xf32>
    %345 = arith.mulf %344, %343 : vector<8x128xf32>
    %cst_115 = arith.constant -0.322396457 : f32
    %346 = vector.broadcast %cst_115 : f32 to vector<8x128xf32>
    %347 = arith.addf %345, %346 : vector<8x128xf32>
    %348 = arith.mulf %347, %343 : vector<8x128xf32>
    %cst_116 = arith.constant -2.40075827 : f32
    %349 = vector.broadcast %cst_116 : f32 to vector<8x128xf32>
    %350 = arith.addf %348, %349 : vector<8x128xf32>
    %351 = arith.mulf %350, %343 : vector<8x128xf32>
    %cst_117 = arith.constant -2.54973245 : f32
    %352 = vector.broadcast %cst_117 : f32 to vector<8x128xf32>
    %353 = arith.addf %351, %352 : vector<8x128xf32>
    %354 = arith.mulf %353, %343 : vector<8x128xf32>
    %cst_118 = arith.constant 4.37466431 : f32
    %355 = vector.broadcast %cst_118 : f32 to vector<8x128xf32>
    %356 = arith.addf %354, %355 : vector<8x128xf32>
    %357 = arith.mulf %356, %343 : vector<8x128xf32>
    %cst_119 = arith.constant 2.938164 : f32
    %358 = vector.broadcast %cst_119 : f32 to vector<8x128xf32>
    %359 = arith.addf %357, %358 : vector<8x128xf32>
    %cst_120 = arith.constant 0.00778469583 : f32
    %360 = vector.broadcast %cst_120 : f32 to vector<8x128xf32>
    %361 = arith.mulf %360, %343 : vector<8x128xf32>
    %cst_121 = arith.constant 0.322467119 : f32
    %362 = vector.broadcast %cst_121 : f32 to vector<8x128xf32>
    %363 = arith.addf %361, %362 : vector<8x128xf32>
    %364 = arith.mulf %363, %343 : vector<8x128xf32>
    %cst_122 = arith.constant 2.44513416 : f32
    %365 = vector.broadcast %cst_122 : f32 to vector<8x128xf32>
    %366 = arith.addf %364, %365 : vector<8x128xf32>
    %367 = arith.mulf %366, %343 : vector<8x128xf32>
    %cst_123 = arith.constant 3.7544086 : f32
    %368 = vector.broadcast %cst_123 : f32 to vector<8x128xf32>
    %369 = arith.addf %367, %368 : vector<8x128xf32>
    %370 = arith.mulf %369, %343 : vector<8x128xf32>
    %cst_124 = arith.constant 1.000000e+00 : f32
    %371 = vector.broadcast %cst_124 : f32 to vector<8x128xf32>
    %372 = arith.addf %370, %371 : vector<8x128xf32>
    %cst_125 = arith.constant 0.000000e+00 : f32
    %373 = vector.broadcast %cst_125 : f32 to vector<8x128xf32>
    %374 = arith.cmpf olt, %300, %373 : vector<8x128xf32>
    %cst_126 = arith.constant 0.000000e+00 : f32
    %375 = vector.broadcast %cst_126 : f32 to vector<8x128xf32>
    %376 = arith.subf %375, %359 : vector<8x128xf32>
    %377 = arith.select %374, %359, %376 : vector<8x128xi1>, vector<8x128xf32>
    %cst_127 = arith.constant 2.425000e-02 : f32
    %378 = vector.broadcast %cst_127 : f32 to vector<8x128xf32>
    %379 = arith.cmpf ogt, %339, %378 : vector<8x128xf32>
    %380 = arith.select %379, %318, %377 : vector<8x128xi1>, vector<8x128xf32>
    %381 = arith.select %379, %334, %372 : vector<8x128xi1>, vector<8x128xf32>
    %382 = arith.divf %380, %381 : vector<8x128xf32>
    %383 = vector.broadcast %7 : f32 to vector<8x128xf32>
    %384 = arith.mulf %382, %383 : vector<8x128xf32>
    %385 = vector.broadcast %5 : i32 to vector<8x128xi32>
    %386 = arith.xori %270, %385 : vector<8x128xi32>
    %c16_i32_128 = arith.constant 16 : i32
    %387 = vector.broadcast %c16_i32_128 : i32 to vector<8x128xi32>
    %388 = arith.shrsi %386, %387 : vector<8x128xi32>
    %c65535_i32_129 = arith.constant 65535 : i32
    %389 = vector.broadcast %c65535_i32_129 : i32 to vector<8x128xi32>
    %390 = arith.andi %388, %389 : vector<8x128xi32>
    %391 = arith.xori %386, %390 : vector<8x128xi32>
    %c2146121005_i32_130 = arith.constant 2146121005 : i32
    %392 = vector.broadcast %c2146121005_i32_130 : i32 to vector<8x128xi32>
    %393 = arith.muli %391, %392 : vector<8x128xi32>
    %c15_i32_131 = arith.constant 15 : i32
    %394 = vector.broadcast %c15_i32_131 : i32 to vector<8x128xi32>
    %395 = arith.shrsi %393, %394 : vector<8x128xi32>
    %c131071_i32_132 = arith.constant 131071 : i32
    %396 = vector.broadcast %c131071_i32_132 : i32 to vector<8x128xi32>
    %397 = arith.andi %395, %396 : vector<8x128xi32>
    %398 = arith.xori %393, %397 : vector<8x128xi32>
    %c-2073254261_i32_133 = arith.constant -2073254261 : i32
    %399 = vector.broadcast %c-2073254261_i32_133 : i32 to vector<8x128xi32>
    %400 = arith.muli %398, %399 : vector<8x128xi32>
    %c16_i32_134 = arith.constant 16 : i32
    %401 = vector.broadcast %c16_i32_134 : i32 to vector<8x128xi32>
    %402 = arith.shrsi %400, %401 : vector<8x128xi32>
    %c65535_i32_135 = arith.constant 65535 : i32
    %403 = vector.broadcast %c65535_i32_135 : i32 to vector<8x128xi32>
    %404 = arith.andi %402, %403 : vector<8x128xi32>
    %405 = arith.xori %400, %404 : vector<8x128xi32>
    %c16777215_i32_136 = arith.constant 16777215 : i32
    %406 = vector.broadcast %c16777215_i32_136 : i32 to vector<8x128xi32>
    %407 = arith.andi %405, %406 : vector<8x128xi32>
    %408 = arith.sitofp %407 : vector<8x128xi32> to vector<8x128xf32>
    %cst_137 = arith.constant 5.000000e-01 : f32
    %409 = vector.broadcast %cst_137 : f32 to vector<8x128xf32>
    %410 = arith.addf %408, %409 : vector<8x128xf32>
    %cst_138 = arith.constant 5.96046448E-8 : f32
    %411 = vector.broadcast %cst_138 : f32 to vector<8x128xf32>
    %412 = arith.mulf %410, %411 : vector<8x128xf32>
    %cst_139 = arith.constant 5.000000e-01 : f32
    %413 = vector.broadcast %cst_139 : f32 to vector<8x128xf32>
    %414 = arith.subf %412, %413 : vector<8x128xf32>
    %415 = arith.addf %268, %384 : vector<8x128xf32>
    %416 = vector.broadcast %135 : vector<8x1xf32> to vector<8x128xf32>
    %417 = arith.addf %415, %416 : vector<8x128xf32>
    %418 = arith.addf %417, %414 : vector<8x128xf32>
    %419 = vector.broadcast %257 : f32 to vector<8x128xf32>
    %420 = arith.addf %418, %419 : vector<8x128xf32>
    %421 = vector.broadcast %255 : f32 to vector<8x128xf32>
    %422 = arith.mulf %420, %421 : vector<8x128xf32>
    %cst_140 = arith.constant 1.000000e+00 : f32
    %423 = vector.broadcast %cst_140 : f32 to vector<8x128xf32>
    %424 = arith.minimumf %422, %423 : vector<8x128xf32>
    %c0_141 = arith.constant 0 : index
    %c0_142 = arith.constant 0 : index
    %c0_143 = arith.constant 0 : index
    %c0_144 = arith.constant 0 : index
    %425 = vector.load %arg6[%c0_141, %c0_142, %c0_143, %c0_144] : memref<1x4x8x128xf32, #tpu.memory_space<vmem>>, vector<1x1x8x128xf32>
    %426 = vector.shape_cast %425 : vector<1x1x8x128xf32> to vector<8x128xf32>
    %427 = vector.shape_cast %424 : vector<8x128xf32> to vector<1x1x8x128xf32>
    tpu.vector_store %arg6[%c0_141, %c0_142, %c0_143, %c0_144], %427 {strides = array<i32>} : memref<1x4x8x128xf32, #tpu.memory_space<vmem>>, vector<1x1x8x128xf32>,
    %428 = arith.index_cast %arg0 : i32 to index
    %c1_145 = arith.constant 1 : index
    %429 = memref.load %arg3[%428, %c1_145] : memref<2x16xf32, #tpu.memory_space<smem>>
    %430 = arith.index_cast %arg0 : i32 to index
    %c5 = arith.constant 5 : index
    %431 = memref.load %arg3[%430, %c5] : memref<2x16xf32, #tpu.memory_space<smem>>
    %432 = arith.index_cast %arg0 : i32 to index
    %c11 = arith.constant 11 : index
    %433 = memref.load %arg3[%432, %c11] : memref<2x16xf32, #tpu.memory_space<smem>>
    %c0_146 = arith.constant 0 : index
    %c1_147 = arith.constant 1 : index
    %c0_148 = arith.constant 0 : index
    %c0_149 = arith.constant 0 : index
    %434 = vector.load %arg4[%c0_146, %c1_147, %c0_148, %c0_149] : memref<1x4x8x128xf32, #tpu.memory_space<vmem>>, vector<1x1x8x128xf32>
    %435 = vector.shape_cast %434 : vector<1x1x8x128xf32> to vector<8x128xf32>
    %cst_150 = arith.constant 0.000000e+00 : f32
    %cst_151 = arith.constant 1.000000e+00 : f32
    %436 = vector.broadcast %cst_150 : f32 to vector<8x128xf32>
    %437 = arith.maximumf %436, %435 : vector<8x128xf32>
    %438 = vector.broadcast %cst_151 : f32 to vector<8x128xf32>
    %439 = arith.minimumf %438, %437 : vector<8x128xf32>
    %c0_152 = arith.constant 0 : index
    %c1_153 = arith.constant 1 : index
    %c0_154 = arith.constant 0 : index
    %c0_155 = arith.constant 0 : index
    %440 = vector.load %arg5[%c0_152, %c1_153, %c0_154, %c0_155] : memref<1x4x8x128xf32, #tpu.memory_space<vmem>>, vector<1x1x8x128xf32>
    %441 = vector.shape_cast %440 : vector<1x1x8x128xf32> to vector<8x128xf32>
    %442 = vector.shape_cast %439 : vector<8x128xf32> to vector<1x1x8x128xf32>
    tpu.vector_store %arg5[%c0_152, %c1_153, %c0_154, %c0_155], %442 {strides = array<i32>} : memref<1x4x8x128xf32, #tpu.memory_space<vmem>>, vector<1x1x8x128xf32>,
    %443 = vector.broadcast %429 : f32 to vector<8x128xf32>
    %444 = arith.mulf %439, %443 : vector<8x128xf32>
    %c2048_i32 = arith.constant 2048 : i32
    %445 = vector.broadcast %c2048_i32 : i32 to vector<8x128xi32>
    %446 = arith.addi %17, %445 : vector<8x128xi32>
    %447 = vector.broadcast %1 : i32 to vector<8x128xi32>
    %448 = arith.xori %446, %447 : vector<8x128xi32>
    %c16_i32_156 = arith.constant 16 : i32
    %449 = vector.broadcast %c16_i32_156 : i32 to vector<8x128xi32>
    %450 = arith.shrsi %448, %449 : vector<8x128xi32>
    %c65535_i32_157 = arith.constant 65535 : i32
    %451 = vector.broadcast %c65535_i32_157 : i32 to vector<8x128xi32>
    %452 = arith.andi %450, %451 : vector<8x128xi32>
    %453 = arith.xori %448, %452 : vector<8x128xi32>
    %c2146121005_i32_158 = arith.constant 2146121005 : i32
    %454 = vector.broadcast %c2146121005_i32_158 : i32 to vector<8x128xi32>
    %455 = arith.muli %453, %454 : vector<8x128xi32>
    %c15_i32_159 = arith.constant 15 : i32
    %456 = vector.broadcast %c15_i32_159 : i32 to vector<8x128xi32>
    %457 = arith.shrsi %455, %456 : vector<8x128xi32>
    %c131071_i32_160 = arith.constant 131071 : i32
    %458 = vector.broadcast %c131071_i32_160 : i32 to vector<8x128xi32>
    %459 = arith.andi %457, %458 : vector<8x128xi32>
    %460 = arith.xori %455, %459 : vector<8x128xi32>
    %c-2073254261_i32_161 = arith.constant -2073254261 : i32
    %461 = vector.broadcast %c-2073254261_i32_161 : i32 to vector<8x128xi32>
    %462 = arith.muli %460, %461 : vector<8x128xi32>
    %c16_i32_162 = arith.constant 16 : i32
    %463 = vector.broadcast %c16_i32_162 : i32 to vector<8x128xi32>
    %464 = arith.shrsi %462, %463 : vector<8x128xi32>
    %c65535_i32_163 = arith.constant 65535 : i32
    %465 = vector.broadcast %c65535_i32_163 : i32 to vector<8x128xi32>
    %466 = arith.andi %464, %465 : vector<8x128xi32>
    %467 = arith.xori %462, %466 : vector<8x128xi32>
    %c16777215_i32_164 = arith.constant 16777215 : i32
    %468 = vector.broadcast %c16777215_i32_164 : i32 to vector<8x128xi32>
    %469 = arith.andi %467, %468 : vector<8x128xi32>
    %470 = arith.sitofp %469 : vector<8x128xi32> to vector<8x128xf32>
    %cst_165 = arith.constant 5.000000e-01 : f32
    %471 = vector.broadcast %cst_165 : f32 to vector<8x128xf32>
    %472 = arith.addf %470, %471 : vector<8x128xf32>
    %cst_166 = arith.constant 5.96046448E-8 : f32
    %473 = vector.broadcast %cst_166 : f32 to vector<8x128xf32>
    %474 = arith.mulf %472, %473 : vector<8x128xf32>
    %cst_167 = arith.constant 5.000000e-01 : f32
    %475 = vector.broadcast %cst_167 : f32 to vector<8x128xf32>
    %476 = arith.subf %474, %475 : vector<8x128xf32>
    %477 = arith.mulf %476, %476 : vector<8x128xf32>
    %cst_168 = arith.constant -39.6968307 : f32
    %478 = vector.broadcast %cst_168 : f32 to vector<8x128xf32>
    %479 = arith.mulf %478, %477 : vector<8x128xf32>
    %cst_169 = arith.constant 220.946106 : f32
    %480 = vector.broadcast %cst_169 : f32 to vector<8x128xf32>
    %481 = arith.addf %479, %480 : vector<8x128xf32>
    %482 = arith.mulf %481, %477 : vector<8x128xf32>
    %cst_170 = arith.constant -275.928497 : f32
    %483 = vector.broadcast %cst_170 : f32 to vector<8x128xf32>
    %484 = arith.addf %482, %483 : vector<8x128xf32>
    %485 = arith.mulf %484, %477 : vector<8x128xf32>
    %cst_171 = arith.constant 138.357758 : f32
    %486 = vector.broadcast %cst_171 : f32 to vector<8x128xf32>
    %487 = arith.addf %485, %486 : vector<8x128xf32>
    %488 = arith.mulf %487, %477 : vector<8x128xf32>
    %cst_172 = arith.constant -30.6647987 : f32
    %489 = vector.broadcast %cst_172 : f32 to vector<8x128xf32>
    %490 = arith.addf %488, %489 : vector<8x128xf32>
    %491 = arith.mulf %490, %477 : vector<8x128xf32>
    %cst_173 = arith.constant 2.50662827 : f32
    %492 = vector.broadcast %cst_173 : f32 to vector<8x128xf32>
    %493 = arith.addf %491, %492 : vector<8x128xf32>
    %494 = arith.mulf %493, %476 : vector<8x128xf32>
    %cst_174 = arith.constant -54.4760971 : f32
    %495 = vector.broadcast %cst_174 : f32 to vector<8x128xf32>
    %496 = arith.mulf %495, %477 : vector<8x128xf32>
    %cst_175 = arith.constant 161.585831 : f32
    %497 = vector.broadcast %cst_175 : f32 to vector<8x128xf32>
    %498 = arith.addf %496, %497 : vector<8x128xf32>
    %499 = arith.mulf %498, %477 : vector<8x128xf32>
    %cst_176 = arith.constant -155.698975 : f32
    %500 = vector.broadcast %cst_176 : f32 to vector<8x128xf32>
    %501 = arith.addf %499, %500 : vector<8x128xf32>
    %502 = arith.mulf %501, %477 : vector<8x128xf32>
    %cst_177 = arith.constant 66.8013153 : f32
    %503 = vector.broadcast %cst_177 : f32 to vector<8x128xf32>
    %504 = arith.addf %502, %503 : vector<8x128xf32>
    %505 = arith.mulf %504, %477 : vector<8x128xf32>
    %cst_178 = arith.constant -13.2806816 : f32
    %506 = vector.broadcast %cst_178 : f32 to vector<8x128xf32>
    %507 = arith.addf %505, %506 : vector<8x128xf32>
    %508 = arith.mulf %507, %477 : vector<8x128xf32>
    %cst_179 = arith.constant 1.000000e+00 : f32
    %509 = vector.broadcast %cst_179 : f32 to vector<8x128xf32>
    %510 = arith.addf %508, %509 : vector<8x128xf32>
    %cst_180 = arith.constant 1.000000e+00 : f32
    %511 = vector.broadcast %cst_180 : f32 to vector<8x128xf32>
    %512 = arith.subf %511, %474 : vector<8x128xf32>
    %513 = arith.minimumf %474, %512 : vector<8x128xf32>
    %cst_181 = arith.constant 9.99999996E-13 : f32
    %514 = vector.broadcast %cst_181 : f32 to vector<8x128xf32>
    %515 = arith.maximumf %513, %514 : vector<8x128xf32>
    %516 = math.log %515 : vector<8x128xf32>
    %cst_182 = arith.constant -2.000000e+00 : f32
    %517 = vector.broadcast %cst_182 : f32 to vector<8x128xf32>
    %518 = arith.mulf %517, %516 : vector<8x128xf32>
    %519 = math.sqrt %518 : vector<8x128xf32>
    %cst_183 = arith.constant -0.0077848942 : f32
    %520 = vector.broadcast %cst_183 : f32 to vector<8x128xf32>
    %521 = arith.mulf %520, %519 : vector<8x128xf32>
    %cst_184 = arith.constant -0.322396457 : f32
    %522 = vector.broadcast %cst_184 : f32 to vector<8x128xf32>
    %523 = arith.addf %521, %522 : vector<8x128xf32>
    %524 = arith.mulf %523, %519 : vector<8x128xf32>
    %cst_185 = arith.constant -2.40075827 : f32
    %525 = vector.broadcast %cst_185 : f32 to vector<8x128xf32>
    %526 = arith.addf %524, %525 : vector<8x128xf32>
    %527 = arith.mulf %526, %519 : vector<8x128xf32>
    %cst_186 = arith.constant -2.54973245 : f32
    %528 = vector.broadcast %cst_186 : f32 to vector<8x128xf32>
    %529 = arith.addf %527, %528 : vector<8x128xf32>
    %530 = arith.mulf %529, %519 : vector<8x128xf32>
    %cst_187 = arith.constant 4.37466431 : f32
    %531 = vector.broadcast %cst_187 : f32 to vector<8x128xf32>
    %532 = arith.addf %530, %531 : vector<8x128xf32>
    %533 = arith.mulf %532, %519 : vector<8x128xf32>
    %cst_188 = arith.constant 2.938164 : f32
    %534 = vector.broadcast %cst_188 : f32 to vector<8x128xf32>
    %535 = arith.addf %533, %534 : vector<8x128xf32>
    %cst_189 = arith.constant 0.00778469583 : f32
    %536 = vector.broadcast %cst_189 : f32 to vector<8x128xf32>
    %537 = arith.mulf %536, %519 : vector<8x128xf32>
    %cst_190 = arith.constant 0.322467119 : f32
    %538 = vector.broadcast %cst_190 : f32 to vector<8x128xf32>
    %539 = arith.addf %537, %538 : vector<8x128xf32>
    %540 = arith.mulf %539, %519 : vector<8x128xf32>
    %cst_191 = arith.constant 2.44513416 : f32
    %541 = vector.broadcast %cst_191 : f32 to vector<8x128xf32>
    %542 = arith.addf %540, %541 : vector<8x128xf32>
    %543 = arith.mulf %542, %519 : vector<8x128xf32>
    %cst_192 = arith.constant 3.7544086 : f32
    %544 = vector.broadcast %cst_192 : f32 to vector<8x128xf32>
    %545 = arith.addf %543, %544 : vector<8x128xf32>
    %546 = arith.mulf %545, %519 : vector<8x128xf32>
    %cst_193 = arith.constant 1.000000e+00 : f32
    %547 = vector.broadcast %cst_193 : f32 to vector<8x128xf32>
    %548 = arith.addf %546, %547 : vector<8x128xf32>
    %cst_194 = arith.constant 0.000000e+00 : f32
    %549 = vector.broadcast %cst_194 : f32 to vector<8x128xf32>
    %550 = arith.cmpf olt, %476, %549 : vector<8x128xf32>
    %cst_195 = arith.constant 0.000000e+00 : f32
    %551 = vector.broadcast %cst_195 : f32 to vector<8x128xf32>
    %552 = arith.subf %551, %535 : vector<8x128xf32>
    %553 = arith.select %550, %535, %552 : vector<8x128xi1>, vector<8x128xf32>
    %cst_196 = arith.constant 2.425000e-02 : f32
    %554 = vector.broadcast %cst_196 : f32 to vector<8x128xf32>
    %555 = arith.cmpf ogt, %515, %554 : vector<8x128xf32>
    %556 = arith.select %555, %494, %553 : vector<8x128xi1>, vector<8x128xf32>
    %557 = arith.select %555, %510, %548 : vector<8x128xi1>, vector<8x128xf32>
    %558 = arith.divf %556, %557 : vector<8x128xf32>
    %559 = vector.broadcast %7 : f32 to vector<8x128xf32>
    %560 = arith.mulf %558, %559 : vector<8x128xf32>
    %561 = vector.broadcast %5 : i32 to vector<8x128xi32>
    %562 = arith.xori %446, %561 : vector<8x128xi32>
    %c16_i32_197 = arith.constant 16 : i32
    %563 = vector.broadcast %c16_i32_197 : i32 to vector<8x128xi32>
    %564 = arith.shrsi %562, %563 : vector<8x128xi32>
    %c65535_i32_198 = arith.constant 65535 : i32
    %565 = vector.broadcast %c65535_i32_198 : i32 to vector<8x128xi32>
    %566 = arith.andi %564, %565 : vector<8x128xi32>
    %567 = arith.xori %562, %566 : vector<8x128xi32>
    %c2146121005_i32_199 = arith.constant 2146121005 : i32
    %568 = vector.broadcast %c2146121005_i32_199 : i32 to vector<8x128xi32>
    %569 = arith.muli %567, %568 : vector<8x128xi32>
    %c15_i32_200 = arith.constant 15 : i32
    %570 = vector.broadcast %c15_i32_200 : i32 to vector<8x128xi32>
    %571 = arith.shrsi %569, %570 : vector<8x128xi32>
    %c131071_i32_201 = arith.constant 131071 : i32
    %572 = vector.broadcast %c131071_i32_201 : i32 to vector<8x128xi32>
    %573 = arith.andi %571, %572 : vector<8x128xi32>
    %574 = arith.xori %569, %573 : vector<8x128xi32>
    %c-2073254261_i32_202 = arith.constant -2073254261 : i32
    %575 = vector.broadcast %c-2073254261_i32_202 : i32 to vector<8x128xi32>
    %576 = arith.muli %574, %575 : vector<8x128xi32>
    %c16_i32_203 = arith.constant 16 : i32
    %577 = vector.broadcast %c16_i32_203 : i32 to vector<8x128xi32>
    %578 = arith.shrsi %576, %577 : vector<8x128xi32>
    %c65535_i32_204 = arith.constant 65535 : i32
    %579 = vector.broadcast %c65535_i32_204 : i32 to vector<8x128xi32>
    %580 = arith.andi %578, %579 : vector<8x128xi32>
    %581 = arith.xori %576, %580 : vector<8x128xi32>
    %c16777215_i32_205 = arith.constant 16777215 : i32
    %582 = vector.broadcast %c16777215_i32_205 : i32 to vector<8x128xi32>
    %583 = arith.andi %581, %582 : vector<8x128xi32>
    %584 = arith.sitofp %583 : vector<8x128xi32> to vector<8x128xf32>
    %cst_206 = arith.constant 5.000000e-01 : f32
    %585 = vector.broadcast %cst_206 : f32 to vector<8x128xf32>
    %586 = arith.addf %584, %585 : vector<8x128xf32>
    %cst_207 = arith.constant 5.96046448E-8 : f32
    %587 = vector.broadcast %cst_207 : f32 to vector<8x128xf32>
    %588 = arith.mulf %586, %587 : vector<8x128xf32>
    %cst_208 = arith.constant 5.000000e-01 : f32
    %589 = vector.broadcast %cst_208 : f32 to vector<8x128xf32>
    %590 = arith.subf %588, %589 : vector<8x128xf32>
    %591 = arith.addf %444, %560 : vector<8x128xf32>
    %592 = vector.broadcast %135 : vector<8x1xf32> to vector<8x128xf32>
    %593 = arith.addf %591, %592 : vector<8x128xf32>
    %594 = arith.addf %593, %590 : vector<8x128xf32>
    %595 = vector.broadcast %433 : f32 to vector<8x128xf32>
    %596 = arith.addf %594, %595 : vector<8x128xf32>
    %597 = vector.broadcast %431 : f32 to vector<8x128xf32>
    %598 = arith.mulf %596, %597 : vector<8x128xf32>
    %cst_209 = arith.constant 1.000000e+00 : f32
    %599 = vector.broadcast %cst_209 : f32 to vector<8x128xf32>
    %600 = arith.minimumf %598, %599 : vector<8x128xf32>
    %c0_210 = arith.constant 0 : index
    %c1_211 = arith.constant 1 : index
    %c0_212 = arith.constant 0 : index
    %c0_213 = arith.constant 0 : index
    %601 = vector.load %arg6[%c0_210, %c1_211, %c0_212, %c0_213] : memref<1x4x8x128xf32, #tpu.memory_space<vmem>>, vector<1x1x8x128xf32>
    %602 = vector.shape_cast %601 : vector<1x1x8x128xf32> to vector<8x128xf32>
    %603 = vector.shape_cast %600 : vector<8x128xf32> to vector<1x1x8x128xf32>
    tpu.vector_store %arg6[%c0_210, %c1_211, %c0_212, %c0_213], %603 {strides = array<i32>} : memref<1x4x8x128xf32, #tpu.memory_space<vmem>>, vector<1x1x8x128xf32>,
    %604 = arith.index_cast %arg0 : i32 to index
    %c2_214 = arith.constant 2 : index
    %605 = memref.load %arg3[%604, %c2_214] : memref<2x16xf32, #tpu.memory_space<smem>>
    %606 = arith.index_cast %arg0 : i32 to index
    %c6 = arith.constant 6 : index
    %607 = memref.load %arg3[%606, %c6] : memref<2x16xf32, #tpu.memory_space<smem>>
    %608 = arith.index_cast %arg0 : i32 to index
    %c12 = arith.constant 12 : index
    %609 = memref.load %arg3[%608, %c12] : memref<2x16xf32, #tpu.memory_space<smem>>
    %c0_215 = arith.constant 0 : index
    %c2_216 = arith.constant 2 : index
    %c0_217 = arith.constant 0 : index
    %c0_218 = arith.constant 0 : index
    %610 = vector.load %arg4[%c0_215, %c2_216, %c0_217, %c0_218] : memref<1x4x8x128xf32, #tpu.memory_space<vmem>>, vector<1x1x8x128xf32>
    %611 = vector.shape_cast %610 : vector<1x1x8x128xf32> to vector<8x128xf32>
    %cst_219 = arith.constant 0.000000e+00 : f32
    %cst_220 = arith.constant 1.000000e+00 : f32
    %612 = vector.broadcast %cst_219 : f32 to vector<8x128xf32>
    %613 = arith.maximumf %612, %611 : vector<8x128xf32>
    %614 = vector.broadcast %cst_220 : f32 to vector<8x128xf32>
    %615 = arith.minimumf %614, %613 : vector<8x128xf32>
    %c0_221 = arith.constant 0 : index
    %c2_222 = arith.constant 2 : index
    %c0_223 = arith.constant 0 : index
    %c0_224 = arith.constant 0 : index
    %616 = vector.load %arg5[%c0_221, %c2_222, %c0_223, %c0_224] : memref<1x4x8x128xf32, #tpu.memory_space<vmem>>, vector<1x1x8x128xf32>
    %617 = vector.shape_cast %616 : vector<1x1x8x128xf32> to vector<8x128xf32>
    %618 = vector.shape_cast %615 : vector<8x128xf32> to vector<1x1x8x128xf32>
    tpu.vector_store %arg5[%c0_221, %c2_222, %c0_223, %c0_224], %618 {strides = array<i32>} : memref<1x4x8x128xf32, #tpu.memory_space<vmem>>, vector<1x1x8x128xf32>,
    %619 = vector.broadcast %605 : f32 to vector<8x128xf32>
    %620 = arith.mulf %615, %619 : vector<8x128xf32>
    %c4096_i32 = arith.constant 4096 : i32
    %621 = vector.broadcast %c4096_i32 : i32 to vector<8x128xi32>
    %622 = arith.addi %17, %621 : vector<8x128xi32>
    %623 = vector.broadcast %1 : i32 to vector<8x128xi32>
    %624 = arith.xori %622, %623 : vector<8x128xi32>
    %c16_i32_225 = arith.constant 16 : i32
    %625 = vector.broadcast %c16_i32_225 : i32 to vector<8x128xi32>
    %626 = arith.shrsi %624, %625 : vector<8x128xi32>
    %c65535_i32_226 = arith.constant 65535 : i32
    %627 = vector.broadcast %c65535_i32_226 : i32 to vector<8x128xi32>
    %628 = arith.andi %626, %627 : vector<8x128xi32>
    %629 = arith.xori %624, %628 : vector<8x128xi32>
    %c2146121005_i32_227 = arith.constant 2146121005 : i32
    %630 = vector.broadcast %c2146121005_i32_227 : i32 to vector<8x128xi32>
    %631 = arith.muli %629, %630 : vector<8x128xi32>
    %c15_i32_228 = arith.constant 15 : i32
    %632 = vector.broadcast %c15_i32_228 : i32 to vector<8x128xi32>
    %633 = arith.shrsi %631, %632 : vector<8x128xi32>
    %c131071_i32_229 = arith.constant 131071 : i32
    %634 = vector.broadcast %c131071_i32_229 : i32 to vector<8x128xi32>
    %635 = arith.andi %633, %634 : vector<8x128xi32>
    %636 = arith.xori %631, %635 : vector<8x128xi32>
    %c-2073254261_i32_230 = arith.constant -2073254261 : i32
    %637 = vector.broadcast %c-2073254261_i32_230 : i32 to vector<8x128xi32>
    %638 = arith.muli %636, %637 : vector<8x128xi32>
    %c16_i32_231 = arith.constant 16 : i32
    %639 = vector.broadcast %c16_i32_231 : i32 to vector<8x128xi32>
    %640 = arith.shrsi %638, %639 : vector<8x128xi32>
    %c65535_i32_232 = arith.constant 65535 : i32
    %641 = vector.broadcast %c65535_i32_232 : i32 to vector<8x128xi32>
    %642 = arith.andi %640, %641 : vector<8x128xi32>
    %643 = arith.xori %638, %642 : vector<8x128xi32>
    %c16777215_i32_233 = arith.constant 16777215 : i32
    %644 = vector.broadcast %c16777215_i32_233 : i32 to vector<8x128xi32>
    %645 = arith.andi %643, %644 : vector<8x128xi32>
    %646 = arith.sitofp %645 : vector<8x128xi32> to vector<8x128xf32>
    %cst_234 = arith.constant 5.000000e-01 : f32
    %647 = vector.broadcast %cst_234 : f32 to vector<8x128xf32>
    %648 = arith.addf %646, %647 : vector<8x128xf32>
    %cst_235 = arith.constant 5.96046448E-8 : f32
    %649 = vector.broadcast %cst_235 : f32 to vector<8x128xf32>
    %650 = arith.mulf %648, %649 : vector<8x128xf32>
    %cst_236 = arith.constant 5.000000e-01 : f32
    %651 = vector.broadcast %cst_236 : f32 to vector<8x128xf32>
    %652 = arith.subf %650, %651 : vector<8x128xf32>
    %653 = arith.mulf %652, %652 : vector<8x128xf32>
    %cst_237 = arith.constant -39.6968307 : f32
    %654 = vector.broadcast %cst_237 : f32 to vector<8x128xf32>
    %655 = arith.mulf %654, %653 : vector<8x128xf32>
    %cst_238 = arith.constant 220.946106 : f32
    %656 = vector.broadcast %cst_238 : f32 to vector<8x128xf32>
    %657 = arith.addf %655, %656 : vector<8x128xf32>
    %658 = arith.mulf %657, %653 : vector<8x128xf32>
    %cst_239 = arith.constant -275.928497 : f32
    %659 = vector.broadcast %cst_239 : f32 to vector<8x128xf32>
    %660 = arith.addf %658, %659 : vector<8x128xf32>
    %661 = arith.mulf %660, %653 : vector<8x128xf32>
    %cst_240 = arith.constant 138.357758 : f32
    %662 = vector.broadcast %cst_240 : f32 to vector<8x128xf32>
    %663 = arith.addf %661, %662 : vector<8x128xf32>
    %664 = arith.mulf %663, %653 : vector<8x128xf32>
    %cst_241 = arith.constant -30.6647987 : f32
    %665 = vector.broadcast %cst_241 : f32 to vector<8x128xf32>
    %666 = arith.addf %664, %665 : vector<8x128xf32>
    %667 = arith.mulf %666, %653 : vector<8x128xf32>
    %cst_242 = arith.constant 2.50662827 : f32
    %668 = vector.broadcast %cst_242 : f32 to vector<8x128xf32>
    %669 = arith.addf %667, %668 : vector<8x128xf32>
    %670 = arith.mulf %669, %652 : vector<8x128xf32>
    %cst_243 = arith.constant -54.4760971 : f32
    %671 = vector.broadcast %cst_243 : f32 to vector<8x128xf32>
    %672 = arith.mulf %671, %653 : vector<8x128xf32>
    %cst_244 = arith.constant 161.585831 : f32
    %673 = vector.broadcast %cst_244 : f32 to vector<8x128xf32>
    %674 = arith.addf %672, %673 : vector<8x128xf32>
    %675 = arith.mulf %674, %653 : vector<8x128xf32>
    %cst_245 = arith.constant -155.698975 : f32
    %676 = vector.broadcast %cst_245 : f32 to vector<8x128xf32>
    %677 = arith.addf %675, %676 : vector<8x128xf32>
    %678 = arith.mulf %677, %653 : vector<8x128xf32>
    %cst_246 = arith.constant 66.8013153 : f32
    %679 = vector.broadcast %cst_246 : f32 to vector<8x128xf32>
    %680 = arith.addf %678, %679 : vector<8x128xf32>
    %681 = arith.mulf %680, %653 : vector<8x128xf32>
    %cst_247 = arith.constant -13.2806816 : f32
    %682 = vector.broadcast %cst_247 : f32 to vector<8x128xf32>
    %683 = arith.addf %681, %682 : vector<8x128xf32>
    %684 = arith.mulf %683, %653 : vector<8x128xf32>
    %cst_248 = arith.constant 1.000000e+00 : f32
    %685 = vector.broadcast %cst_248 : f32 to vector<8x128xf32>
    %686 = arith.addf %684, %685 : vector<8x128xf32>
    %cst_249 = arith.constant 1.000000e+00 : f32
    %687 = vector.broadcast %cst_249 : f32 to vector<8x128xf32>
    %688 = arith.subf %687, %650 : vector<8x128xf32>
    %689 = arith.minimumf %650, %688 : vector<8x128xf32>
    %cst_250 = arith.constant 9.99999996E-13 : f32
    %690 = vector.broadcast %cst_250 : f32 to vector<8x128xf32>
    %691 = arith.maximumf %689, %690 : vector<8x128xf32>
    %692 = math.log %691 : vector<8x128xf32>
    %cst_251 = arith.constant -2.000000e+00 : f32
    %693 = vector.broadcast %cst_251 : f32 to vector<8x128xf32>
    %694 = arith.mulf %693, %692 : vector<8x128xf32>
    %695 = math.sqrt %694 : vector<8x128xf32>
    %cst_252 = arith.constant -0.0077848942 : f32
    %696 = vector.broadcast %cst_252 : f32 to vector<8x128xf32>
    %697 = arith.mulf %696, %695 : vector<8x128xf32>
    %cst_253 = arith.constant -0.322396457 : f32
    %698 = vector.broadcast %cst_253 : f32 to vector<8x128xf32>
    %699 = arith.addf %697, %698 : vector<8x128xf32>
    %700 = arith.mulf %699, %695 : vector<8x128xf32>
    %cst_254 = arith.constant -2.40075827 : f32
    %701 = vector.broadcast %cst_254 : f32 to vector<8x128xf32>
    %702 = arith.addf %700, %701 : vector<8x128xf32>
    %703 = arith.mulf %702, %695 : vector<8x128xf32>
    %cst_255 = arith.constant -2.54973245 : f32
    %704 = vector.broadcast %cst_255 : f32 to vector<8x128xf32>
    %705 = arith.addf %703, %704 : vector<8x128xf32>
    %706 = arith.mulf %705, %695 : vector<8x128xf32>
    %cst_256 = arith.constant 4.37466431 : f32
    %707 = vector.broadcast %cst_256 : f32 to vector<8x128xf32>
    %708 = arith.addf %706, %707 : vector<8x128xf32>
    %709 = arith.mulf %708, %695 : vector<8x128xf32>
    %cst_257 = arith.constant 2.938164 : f32
    %710 = vector.broadcast %cst_257 : f32 to vector<8x128xf32>
    %711 = arith.addf %709, %710 : vector<8x128xf32>
    %cst_258 = arith.constant 0.00778469583 : f32
    %712 = vector.broadcast %cst_258 : f32 to vector<8x128xf32>
    %713 = arith.mulf %712, %695 : vector<8x128xf32>
    %cst_259 = arith.constant 0.322467119 : f32
    %714 = vector.broadcast %cst_259 : f32 to vector<8x128xf32>
    %715 = arith.addf %713, %714 : vector<8x128xf32>
    %716 = arith.mulf %715, %695 : vector<8x128xf32>
    %cst_260 = arith.constant 2.44513416 : f32
    %717 = vector.broadcast %cst_260 : f32 to vector<8x128xf32>
    %718 = arith.addf %716, %717 : vector<8x128xf32>
    %719 = arith.mulf %718, %695 : vector<8x128xf32>
    %cst_261 = arith.constant 3.7544086 : f32
    %720 = vector.broadcast %cst_261 : f32 to vector<8x128xf32>
    %721 = arith.addf %719, %720 : vector<8x128xf32>
    %722 = arith.mulf %721, %695 : vector<8x128xf32>
    %cst_262 = arith.constant 1.000000e+00 : f32
    %723 = vector.broadcast %cst_262 : f32 to vector<8x128xf32>
    %724 = arith.addf %722, %723 : vector<8x128xf32>
    %cst_263 = arith.constant 0.000000e+00 : f32
    %725 = vector.broadcast %cst_263 : f32 to vector<8x128xf32>
    %726 = arith.cmpf olt, %652, %725 : vector<8x128xf32>
    %cst_264 = arith.constant 0.000000e+00 : f32
    %727 = vector.broadcast %cst_264 : f32 to vector<8x128xf32>
    %728 = arith.subf %727, %711 : vector<8x128xf32>
    %729 = arith.select %726, %711, %728 : vector<8x128xi1>, vector<8x128xf32>
    %cst_265 = arith.constant 2.425000e-02 : f32
    %730 = vector.broadcast %cst_265 : f32 to vector<8x128xf32>
    %731 = arith.cmpf ogt, %691, %730 : vector<8x128xf32>
    %732 = arith.select %731, %670, %729 : vector<8x128xi1>, vector<8x128xf32>
    %733 = arith.select %731, %686, %724 : vector<8x128xi1>, vector<8x128xf32>
    %734 = arith.divf %732, %733 : vector<8x128xf32>
    %735 = vector.broadcast %7 : f32 to vector<8x128xf32>
    %736 = arith.mulf %734, %735 : vector<8x128xf32>
    %737 = vector.broadcast %5 : i32 to vector<8x128xi32>
    %738 = arith.xori %622, %737 : vector<8x128xi32>
    %c16_i32_266 = arith.constant 16 : i32
    %739 = vector.broadcast %c16_i32_266 : i32 to vector<8x128xi32>
    %740 = arith.shrsi %738, %739 : vector<8x128xi32>
    %c65535_i32_267 = arith.constant 65535 : i32
    %741 = vector.broadcast %c65535_i32_267 : i32 to vector<8x128xi32>
    %742 = arith.andi %740, %741 : vector<8x128xi32>
    %743 = arith.xori %738, %742 : vector<8x128xi32>
    %c2146121005_i32_268 = arith.constant 2146121005 : i32
    %744 = vector.broadcast %c2146121005_i32_268 : i32 to vector<8x128xi32>
    %745 = arith.muli %743, %744 : vector<8x128xi32>
    %c15_i32_269 = arith.constant 15 : i32
    %746 = vector.broadcast %c15_i32_269 : i32 to vector<8x128xi32>
    %747 = arith.shrsi %745, %746 : vector<8x128xi32>
    %c131071_i32_270 = arith.constant 131071 : i32
    %748 = vector.broadcast %c131071_i32_270 : i32 to vector<8x128xi32>
    %749 = arith.andi %747, %748 : vector<8x128xi32>
    %750 = arith.xori %745, %749 : vector<8x128xi32>
    %c-2073254261_i32_271 = arith.constant -2073254261 : i32
    %751 = vector.broadcast %c-2073254261_i32_271 : i32 to vector<8x128xi32>
    %752 = arith.muli %750, %751 : vector<8x128xi32>
    %c16_i32_272 = arith.constant 16 : i32
    %753 = vector.broadcast %c16_i32_272 : i32 to vector<8x128xi32>
    %754 = arith.shrsi %752, %753 : vector<8x128xi32>
    %c65535_i32_273 = arith.constant 65535 : i32
    %755 = vector.broadcast %c65535_i32_273 : i32 to vector<8x128xi32>
    %756 = arith.andi %754, %755 : vector<8x128xi32>
    %757 = arith.xori %752, %756 : vector<8x128xi32>
    %c16777215_i32_274 = arith.constant 16777215 : i32
    %758 = vector.broadcast %c16777215_i32_274 : i32 to vector<8x128xi32>
    %759 = arith.andi %757, %758 : vector<8x128xi32>
    %760 = arith.sitofp %759 : vector<8x128xi32> to vector<8x128xf32>
    %cst_275 = arith.constant 5.000000e-01 : f32
    %761 = vector.broadcast %cst_275 : f32 to vector<8x128xf32>
    %762 = arith.addf %760, %761 : vector<8x128xf32>
    %cst_276 = arith.constant 5.96046448E-8 : f32
    %763 = vector.broadcast %cst_276 : f32 to vector<8x128xf32>
    %764 = arith.mulf %762, %763 : vector<8x128xf32>
    %cst_277 = arith.constant 5.000000e-01 : f32
    %765 = vector.broadcast %cst_277 : f32 to vector<8x128xf32>
    %766 = arith.subf %764, %765 : vector<8x128xf32>
    %767 = arith.addf %620, %736 : vector<8x128xf32>
    %768 = vector.broadcast %251 : vector<8x1xf32> to vector<8x128xf32>
    %769 = arith.addf %767, %768 : vector<8x128xf32>
    %770 = arith.addf %769, %766 : vector<8x128xf32>
    %771 = vector.broadcast %609 : f32 to vector<8x128xf32>
    %772 = arith.addf %770, %771 : vector<8x128xf32>
    %773 = vector.broadcast %607 : f32 to vector<8x128xf32>
    %774 = arith.mulf %772, %773 : vector<8x128xf32>
    %cst_278 = arith.constant 1.000000e+00 : f32
    %775 = vector.broadcast %cst_278 : f32 to vector<8x128xf32>
    %776 = arith.minimumf %774, %775 : vector<8x128xf32>
    %c0_279 = arith.constant 0 : index
    %c2_280 = arith.constant 2 : index
    %c0_281 = arith.constant 0 : index
    %c0_282 = arith.constant 0 : index
    %777 = vector.load %arg6[%c0_279, %c2_280, %c0_281, %c0_282] : memref<1x4x8x128xf32, #tpu.memory_space<vmem>>, vector<1x1x8x128xf32>
    %778 = vector.shape_cast %777 : vector<1x1x8x128xf32> to vector<8x128xf32>
    %779 = vector.shape_cast %776 : vector<8x128xf32> to vector<1x1x8x128xf32>
    tpu.vector_store %arg6[%c0_279, %c2_280, %c0_281, %c0_282], %779 {strides = array<i32>} : memref<1x4x8x128xf32, #tpu.memory_space<vmem>>, vector<1x1x8x128xf32>,
    %780 = arith.index_cast %arg0 : i32 to index
    %c3 = arith.constant 3 : index
    %781 = memref.load %arg3[%780, %c3] : memref<2x16xf32, #tpu.memory_space<smem>>
    %782 = arith.index_cast %arg0 : i32 to index
    %c7 = arith.constant 7 : index
    %783 = memref.load %arg3[%782, %c7] : memref<2x16xf32, #tpu.memory_space<smem>>
    %784 = arith.index_cast %arg0 : i32 to index
    %c13 = arith.constant 13 : index
    %785 = memref.load %arg3[%784, %c13] : memref<2x16xf32, #tpu.memory_space<smem>>
    %c0_283 = arith.constant 0 : index
    %c3_284 = arith.constant 3 : index
    %c0_285 = arith.constant 0 : index
    %c0_286 = arith.constant 0 : index
    %786 = vector.load %arg4[%c0_283, %c3_284, %c0_285, %c0_286] : memref<1x4x8x128xf32, #tpu.memory_space<vmem>>, vector<1x1x8x128xf32>
    %787 = vector.shape_cast %786 : vector<1x1x8x128xf32> to vector<8x128xf32>
    %cst_287 = arith.constant 0.000000e+00 : f32
    %cst_288 = arith.constant 1.000000e+00 : f32
    %788 = vector.broadcast %cst_287 : f32 to vector<8x128xf32>
    %789 = arith.maximumf %788, %787 : vector<8x128xf32>
    %790 = vector.broadcast %cst_288 : f32 to vector<8x128xf32>
    %791 = arith.minimumf %790, %789 : vector<8x128xf32>
    %c0_289 = arith.constant 0 : index
    %c3_290 = arith.constant 3 : index
    %c0_291 = arith.constant 0 : index
    %c0_292 = arith.constant 0 : index
    %792 = vector.load %arg5[%c0_289, %c3_290, %c0_291, %c0_292] : memref<1x4x8x128xf32, #tpu.memory_space<vmem>>, vector<1x1x8x128xf32>
    %793 = vector.shape_cast %792 : vector<1x1x8x128xf32> to vector<8x128xf32>
    %794 = vector.shape_cast %791 : vector<8x128xf32> to vector<1x1x8x128xf32>
    tpu.vector_store %arg5[%c0_289, %c3_290, %c0_291, %c0_292], %794 {strides = array<i32>} : memref<1x4x8x128xf32, #tpu.memory_space<vmem>>, vector<1x1x8x128xf32>,
    %795 = vector.broadcast %781 : f32 to vector<8x128xf32>
    %796 = arith.mulf %791, %795 : vector<8x128xf32>
    %c6144_i32 = arith.constant 6144 : i32
    %797 = vector.broadcast %c6144_i32 : i32 to vector<8x128xi32>
    %798 = arith.addi %17, %797 : vector<8x128xi32>
    %799 = vector.broadcast %1 : i32 to vector<8x128xi32>
    %800 = arith.xori %798, %799 : vector<8x128xi32>
    %c16_i32_293 = arith.constant 16 : i32
    %801 = vector.broadcast %c16_i32_293 : i32 to vector<8x128xi32>
    %802 = arith.shrsi %800, %801 : vector<8x128xi32>
    %c65535_i32_294 = arith.constant 65535 : i32
    %803 = vector.broadcast %c65535_i32_294 : i32 to vector<8x128xi32>
    %804 = arith.andi %802, %803 : vector<8x128xi32>
    %805 = arith.xori %800, %804 : vector<8x128xi32>
    %c2146121005_i32_295 = arith.constant 2146121005 : i32
    %806 = vector.broadcast %c2146121005_i32_295 : i32 to vector<8x128xi32>
    %807 = arith.muli %805, %806 : vector<8x128xi32>
    %c15_i32_296 = arith.constant 15 : i32
    %808 = vector.broadcast %c15_i32_296 : i32 to vector<8x128xi32>
    %809 = arith.shrsi %807, %808 : vector<8x128xi32>
    %c131071_i32_297 = arith.constant 131071 : i32
    %810 = vector.broadcast %c131071_i32_297 : i32 to vector<8x128xi32>
    %811 = arith.andi %809, %810 : vector<8x128xi32>
    %812 = arith.xori %807, %811 : vector<8x128xi32>
    %c-2073254261_i32_298 = arith.constant -2073254261 : i32
    %813 = vector.broadcast %c-2073254261_i32_298 : i32 to vector<8x128xi32>
    %814 = arith.muli %812, %813 : vector<8x128xi32>
    %c16_i32_299 = arith.constant 16 : i32
    %815 = vector.broadcast %c16_i32_299 : i32 to vector<8x128xi32>
    %816 = arith.shrsi %814, %815 : vector<8x128xi32>
    %c65535_i32_300 = arith.constant 65535 : i32
    %817 = vector.broadcast %c65535_i32_300 : i32 to vector<8x128xi32>
    %818 = arith.andi %816, %817 : vector<8x128xi32>
    %819 = arith.xori %814, %818 : vector<8x128xi32>
    %c16777215_i32_301 = arith.constant 16777215 : i32
    %820 = vector.broadcast %c16777215_i32_301 : i32 to vector<8x128xi32>
    %821 = arith.andi %819, %820 : vector<8x128xi32>
    %822 = arith.sitofp %821 : vector<8x128xi32> to vector<8x128xf32>
    %cst_302 = arith.constant 5.000000e-01 : f32
    %823 = vector.broadcast %cst_302 : f32 to vector<8x128xf32>
    %824 = arith.addf %822, %823 : vector<8x128xf32>
    %cst_303 = arith.constant 5.96046448E-8 : f32
    %825 = vector.broadcast %cst_303 : f32 to vector<8x128xf32>
    %826 = arith.mulf %824, %825 : vector<8x128xf32>
    %cst_304 = arith.constant 5.000000e-01 : f32
    %827 = vector.broadcast %cst_304 : f32 to vector<8x128xf32>
    %828 = arith.subf %826, %827 : vector<8x128xf32>
    %829 = arith.mulf %828, %828 : vector<8x128xf32>
    %cst_305 = arith.constant -39.6968307 : f32
    %830 = vector.broadcast %cst_305 : f32 to vector<8x128xf32>
    %831 = arith.mulf %830, %829 : vector<8x128xf32>
    %cst_306 = arith.constant 220.946106 : f32
    %832 = vector.broadcast %cst_306 : f32 to vector<8x128xf32>
    %833 = arith.addf %831, %832 : vector<8x128xf32>
    %834 = arith.mulf %833, %829 : vector<8x128xf32>
    %cst_307 = arith.constant -275.928497 : f32
    %835 = vector.broadcast %cst_307 : f32 to vector<8x128xf32>
    %836 = arith.addf %834, %835 : vector<8x128xf32>
    %837 = arith.mulf %836, %829 : vector<8x128xf32>
    %cst_308 = arith.constant 138.357758 : f32
    %838 = vector.broadcast %cst_308 : f32 to vector<8x128xf32>
    %839 = arith.addf %837, %838 : vector<8x128xf32>
    %840 = arith.mulf %839, %829 : vector<8x128xf32>
    %cst_309 = arith.constant -30.6647987 : f32
    %841 = vector.broadcast %cst_309 : f32 to vector<8x128xf32>
    %842 = arith.addf %840, %841 : vector<8x128xf32>
    %843 = arith.mulf %842, %829 : vector<8x128xf32>
    %cst_310 = arith.constant 2.50662827 : f32
    %844 = vector.broadcast %cst_310 : f32 to vector<8x128xf32>
    %845 = arith.addf %843, %844 : vector<8x128xf32>
    %846 = arith.mulf %845, %828 : vector<8x128xf32>
    %cst_311 = arith.constant -54.4760971 : f32
    %847 = vector.broadcast %cst_311 : f32 to vector<8x128xf32>
    %848 = arith.mulf %847, %829 : vector<8x128xf32>
    %cst_312 = arith.constant 161.585831 : f32
    %849 = vector.broadcast %cst_312 : f32 to vector<8x128xf32>
    %850 = arith.addf %848, %849 : vector<8x128xf32>
    %851 = arith.mulf %850, %829 : vector<8x128xf32>
    %cst_313 = arith.constant -155.698975 : f32
    %852 = vector.broadcast %cst_313 : f32 to vector<8x128xf32>
    %853 = arith.addf %851, %852 : vector<8x128xf32>
    %854 = arith.mulf %853, %829 : vector<8x128xf32>
    %cst_314 = arith.constant 66.8013153 : f32
    %855 = vector.broadcast %cst_314 : f32 to vector<8x128xf32>
    %856 = arith.addf %854, %855 : vector<8x128xf32>
    %857 = arith.mulf %856, %829 : vector<8x128xf32>
    %cst_315 = arith.constant -13.2806816 : f32
    %858 = vector.broadcast %cst_315 : f32 to vector<8x128xf32>
    %859 = arith.addf %857, %858 : vector<8x128xf32>
    %860 = arith.mulf %859, %829 : vector<8x128xf32>
    %cst_316 = arith.constant 1.000000e+00 : f32
    %861 = vector.broadcast %cst_316 : f32 to vector<8x128xf32>
    %862 = arith.addf %860, %861 : vector<8x128xf32>
    %cst_317 = arith.constant 1.000000e+00 : f32
    %863 = vector.broadcast %cst_317 : f32 to vector<8x128xf32>
    %864 = arith.subf %863, %826 : vector<8x128xf32>
    %865 = arith.minimumf %826, %864 : vector<8x128xf32>
    %cst_318 = arith.constant 9.99999996E-13 : f32
    %866 = vector.broadcast %cst_318 : f32 to vector<8x128xf32>
    %867 = arith.maximumf %865, %866 : vector<8x128xf32>
    %868 = math.log %867 : vector<8x128xf32>
    %cst_319 = arith.constant -2.000000e+00 : f32
    %869 = vector.broadcast %cst_319 : f32 to vector<8x128xf32>
    %870 = arith.mulf %869, %868 : vector<8x128xf32>
    %871 = math.sqrt %870 : vector<8x128xf32>
    %cst_320 = arith.constant -0.0077848942 : f32
    %872 = vector.broadcast %cst_320 : f32 to vector<8x128xf32>
    %873 = arith.mulf %872, %871 : vector<8x128xf32>
    %cst_321 = arith.constant -0.322396457 : f32
    %874 = vector.broadcast %cst_321 : f32 to vector<8x128xf32>
    %875 = arith.addf %873, %874 : vector<8x128xf32>
    %876 = arith.mulf %875, %871 : vector<8x128xf32>
    %cst_322 = arith.constant -2.40075827 : f32
    %877 = vector.broadcast %cst_322 : f32 to vector<8x128xf32>
    %878 = arith.addf %876, %877 : vector<8x128xf32>
    %879 = arith.mulf %878, %871 : vector<8x128xf32>
    %cst_323 = arith.constant -2.54973245 : f32
    %880 = vector.broadcast %cst_323 : f32 to vector<8x128xf32>
    %881 = arith.addf %879, %880 : vector<8x128xf32>
    %882 = arith.mulf %881, %871 : vector<8x128xf32>
    %cst_324 = arith.constant 4.37466431 : f32
    %883 = vector.broadcast %cst_324 : f32 to vector<8x128xf32>
    %884 = arith.addf %882, %883 : vector<8x128xf32>
    %885 = arith.mulf %884, %871 : vector<8x128xf32>
    %cst_325 = arith.constant 2.938164 : f32
    %886 = vector.broadcast %cst_325 : f32 to vector<8x128xf32>
    %887 = arith.addf %885, %886 : vector<8x128xf32>
    %cst_326 = arith.constant 0.00778469583 : f32
    %888 = vector.broadcast %cst_326 : f32 to vector<8x128xf32>
    %889 = arith.mulf %888, %871 : vector<8x128xf32>
    %cst_327 = arith.constant 0.322467119 : f32
    %890 = vector.broadcast %cst_327 : f32 to vector<8x128xf32>
    %891 = arith.addf %889, %890 : vector<8x128xf32>
    %892 = arith.mulf %891, %871 : vector<8x128xf32>
    %cst_328 = arith.constant 2.44513416 : f32
    %893 = vector.broadcast %cst_328 : f32 to vector<8x128xf32>
    %894 = arith.addf %892, %893 : vector<8x128xf32>
    %895 = arith.mulf %894, %871 : vector<8x128xf32>
    %cst_329 = arith.constant 3.7544086 : f32
    %896 = vector.broadcast %cst_329 : f32 to vector<8x128xf32>
    %897 = arith.addf %895, %896 : vector<8x128xf32>
    %898 = arith.mulf %897, %871 : vector<8x128xf32>
    %cst_330 = arith.constant 1.000000e+00 : f32
    %899 = vector.broadcast %cst_330 : f32 to vector<8x128xf32>
    %900 = arith.addf %898, %899 : vector<8x128xf32>
    %cst_331 = arith.constant 0.000000e+00 : f32
    %901 = vector.broadcast %cst_331 : f32 to vector<8x128xf32>
    %902 = arith.cmpf olt, %828, %901 : vector<8x128xf32>
    %cst_332 = arith.constant 0.000000e+00 : f32
    %903 = vector.broadcast %cst_332 : f32 to vector<8x128xf32>
    %904 = arith.subf %903, %887 : vector<8x128xf32>
    %905 = arith.select %902, %887, %904 : vector<8x128xi1>, vector<8x128xf32>
    %cst_333 = arith.constant 2.425000e-02 : f32
    %906 = vector.broadcast %cst_333 : f32 to vector<8x128xf32>
    %907 = arith.cmpf ogt, %867, %906 : vector<8x128xf32>
    %908 = arith.select %907, %846, %905 : vector<8x128xi1>, vector<8x128xf32>
    %909 = arith.select %907, %862, %900 : vector<8x128xi1>, vector<8x128xf32>
    %910 = arith.divf %908, %909 : vector<8x128xf32>
    %911 = vector.broadcast %7 : f32 to vector<8x128xf32>
    %912 = arith.mulf %910, %911 : vector<8x128xf32>
    %913 = vector.broadcast %5 : i32 to vector<8x128xi32>
    %914 = arith.xori %798, %913 : vector<8x128xi32>
    %c16_i32_334 = arith.constant 16 : i32
    %915 = vector.broadcast %c16_i32_334 : i32 to vector<8x128xi32>
    %916 = arith.shrsi %914, %915 : vector<8x128xi32>
    %c65535_i32_335 = arith.constant 65535 : i32
    %917 = vector.broadcast %c65535_i32_335 : i32 to vector<8x128xi32>
    %918 = arith.andi %916, %917 : vector<8x128xi32>
    %919 = arith.xori %914, %918 : vector<8x128xi32>
    %c2146121005_i32_336 = arith.constant 2146121005 : i32
    %920 = vector.broadcast %c2146121005_i32_336 : i32 to vector<8x128xi32>
    %921 = arith.muli %919, %920 : vector<8x128xi32>
    %c15_i32_337 = arith.constant 15 : i32
    %922 = vector.broadcast %c15_i32_337 : i32 to vector<8x128xi32>
    %923 = arith.shrsi %921, %922 : vector<8x128xi32>
    %c131071_i32_338 = arith.constant 131071 : i32
    %924 = vector.broadcast %c131071_i32_338 : i32 to vector<8x128xi32>
    %925 = arith.andi %923, %924 : vector<8x128xi32>
    %926 = arith.xori %921, %925 : vector<8x128xi32>
    %c-2073254261_i32_339 = arith.constant -2073254261 : i32
    %927 = vector.broadcast %c-2073254261_i32_339 : i32 to vector<8x128xi32>
    %928 = arith.muli %926, %927 : vector<8x128xi32>
    %c16_i32_340 = arith.constant 16 : i32
    %929 = vector.broadcast %c16_i32_340 : i32 to vector<8x128xi32>
    %930 = arith.shrsi %928, %929 : vector<8x128xi32>
    %c65535_i32_341 = arith.constant 65535 : i32
    %931 = vector.broadcast %c65535_i32_341 : i32 to vector<8x128xi32>
    %932 = arith.andi %930, %931 : vector<8x128xi32>
    %933 = arith.xori %928, %932 : vector<8x128xi32>
    %c16777215_i32_342 = arith.constant 16777215 : i32
    %934 = vector.broadcast %c16777215_i32_342 : i32 to vector<8x128xi32>
    %935 = arith.andi %933, %934 : vector<8x128xi32>
    %936 = arith.sitofp %935 : vector<8x128xi32> to vector<8x128xf32>
    %cst_343 = arith.constant 5.000000e-01 : f32
    %937 = vector.broadcast %cst_343 : f32 to vector<8x128xf32>
    %938 = arith.addf %936, %937 : vector<8x128xf32>
    %cst_344 = arith.constant 5.96046448E-8 : f32
    %939 = vector.broadcast %cst_344 : f32 to vector<8x128xf32>
    %940 = arith.mulf %938, %939 : vector<8x128xf32>
    %cst_345 = arith.constant 5.000000e-01 : f32
    %941 = vector.broadcast %cst_345 : f32 to vector<8x128xf32>
    %942 = arith.subf %940, %941 : vector<8x128xf32>
    %943 = arith.addf %796, %912 : vector<8x128xf32>
    %944 = vector.broadcast %251 : vector<8x1xf32> to vector<8x128xf32>
    %945 = arith.addf %943, %944 : vector<8x128xf32>
    %946 = arith.addf %945, %942 : vector<8x128xf32>
    %947 = vector.broadcast %785 : f32 to vector<8x128xf32>
    %948 = arith.addf %946, %947 : vector<8x128xf32>
    %949 = vector.broadcast %783 : f32 to vector<8x128xf32>
    %950 = arith.mulf %948, %949 : vector<8x128xf32>
    %cst_346 = arith.constant 1.000000e+00 : f32
    %951 = vector.broadcast %cst_346 : f32 to vector<8x128xf32>
    %952 = arith.minimumf %950, %951 : vector<8x128xf32>
    %c0_347 = arith.constant 0 : index
    %c3_348 = arith.constant 3 : index
    %c0_349 = arith.constant 0 : index
    %c0_350 = arith.constant 0 : index
    %953 = vector.load %arg6[%c0_347, %c3_348, %c0_349, %c0_350] : memref<1x4x8x128xf32, #tpu.memory_space<vmem>>, vector<1x1x8x128xf32>
    %954 = vector.shape_cast %953 : vector<1x1x8x128xf32> to vector<8x128xf32>
    %955 = vector.shape_cast %952 : vector<8x128xf32> to vector<1x1x8x128xf32>
    tpu.vector_store %arg6[%c0_347, %c3_348, %c0_349, %c0_350], %955 {strides = array<i32>} : memref<1x4x8x128xf32, #tpu.memory_space<vmem>>, vector<1x1x8x128xf32>,
    return
  }
  func.func @transform_0(%arg0: i32, %arg1: i32, %arg2: memref<2x4xi32, #tpu.memory_space<smem>>, %arg3: memref<2x16xf32, #tpu.memory_space<smem>>) -> (i32, i32, i32, i32) {
    %c0_i32 = arith.constant 0 : i32
    %c0_i32_0 = arith.constant 0 : i32
    %c0_i32_1 = arith.constant 0 : i32
    return %arg0, %c0_i32, %arg1, %c0_i32_0 : i32, i32, i32, i32
  }
  func.func @transform_1(%arg0: i32, %arg1: i32, %arg2: memref<2x4xi32, #tpu.memory_space<smem>>, %arg3: memref<2x16xf32, #tpu.memory_space<smem>>) -> (i32, i32, i32, i32) {
    %c0_i32 = arith.constant 0 : i32
    %c0_i32_0 = arith.constant 0 : i32
    %c0_i32_1 = arith.constant 0 : i32
    return %arg0, %c0_i32, %arg1, %c0_i32_0 : i32, i32, i32, i32
  }
  func.func @transform_2(%arg0: i32, %arg1: i32, %arg2: memref<2x4xi32, #tpu.memory_space<smem>>, %arg3: memref<2x16xf32, #tpu.memory_space<smem>>) -> (i32, i32, i32, i32) {
    %c0_i32 = arith.constant 0 : i32
    %c0_i32_0 = arith.constant 0 : i32
    %c0_i32_1 = arith.constant 0 : i32
    return %arg0, %c0_i32, %arg1, %c0_i32_0 : i32, i32, i32, i32
  }
}

</mosaic_0001>

<llo_original>
// kernel: tpu_custom_call.1
$region0: #{tpu_custom_call.1}
  #allocation0 [shape = 'u32[]', space=smem, size = 0x4, offset = 0x4, fixed_abs, tag = 'smem constant byte address 0x4 - core index']
  #allocation1 [shape = 'u32[144,128]{1,0:T(1,128)}', space=vmem, size = 0x12000, scoped, tag = 'internal scratch']
  #allocation2 [shape = 's32[1]{0}', space=sflag, size = 0x4, scoped, tag = 'scoped memory for tpu_custom_call.1']
  #allocation3 [shape = 'u8[1024]{0}', space=smem, size = 0x400, scoped, tag = 'prefetched SMEM operand 0']
  #allocation4 [shape = 'u8[1024]{0}', space=smem, size = 0x400, scoped, tag = 'prefetched SMEM operand 1']
  %s0 = inlined_call_operand.hbm [shape: s32[2,4], index: 0, kind: input, shape index: {}]
  %s1 = inlined_call_operand.hbm [shape: f32[2,16], index: 1, kind: input, shape index: {}]
  %s2 = inlined_call_operand.hbm [shape: f32[2,4,16,128], index: 2, kind: input, shape index: {}]
  %s3 = inlined_call_operand.hbm [shape: f32[2,4,16,128], index: 3, kind: output, shape index: {0}]
  %s4 = inlined_call_operand.hbm [shape: f32[2,4,16,128], index: 4, kind: output, shape index: {1}]
  %5 = xla_tuple %s3, %s4
  %s6 = sld [smem:[#allocation0]]
  $region49: #{tpu_custom_call.1} parent=0
    _
  %s8 = ssub.s32 1, %s6
  %s9 = scalar_select 0, %s8, %s6
  %11 = dma.hbm_to_smem %s0, 32, [#allocation3], [#allocation2]
  %13 = dma.hbm_to_smem %s1, 32, [#allocation4], [#allocation2]
  %14 = dma.done [#allocation2], 64
  %15 = sfence
  $region1: #{tpu_custom_call.1} parent=0
    #allocation5 [shape = 'u8[32768]{0}', space=vmem, size = 0x8000, scoped, tag = 'input window, operand 2']
    #allocation6 [shape = 's32[2]{0}', space=sflag, size = 0x8, scoped, tag = 'scoped memory for tpu_custom_call.1']
    #allocation7 [shape = 's32[2]{0}', space=sflag, size = 0x8, scoped, tag = 'scoped memory for tpu_custom_call.1']
    #allocation8 [shape = 'u8[32768]{0}', space=vmem, size = 0x8000, scoped, tag = 'output window, operand 0']
    #allocation9 [shape = 'u8[32768]{0}', space=vmem, size = 0x8000, scoped, tag = 'output window, operand 1']
    #allocation10 [shape = 's32[2]{0}', space=sflag, size = 0x8, scoped, tag = 'scoped memory for tpu_custom_call.1']
    %16 = vsyncpa [#allocation6], 0
    %s17 = scalar_lea.sflag [#allocation6], 1
    %18 = vsyncpa %s17, 0
    %19 = vsyncpa [#allocation7], 0
    %s20 = scalar_lea.sflag [#allocation7], 1
    %21 = vsyncpa %s20, 0
    %22 = vsyncpa [#allocation10], 0
    %s23 = scalar_lea.sflag [#allocation10], 1
    %24 = vsyncpa %s23, 0
    loop: start=0, step=1, limit=6
    $region2: #{tpu_custom_call.1} parent=1 // loop_pre_header
      _
    $region3: #{tpu_custom_call.1} parent=1 // loop_header
      %s26 = sphi 0, %s30
      %p27 = scmp.ge.s32.totalorder %s26, 6
      %s33 = sphi 0, %s45
      %s34 = sphi 0, %s41
      %s35 = sphi 0, %s33
      %s36 = sphi 0, %s34
      %s37 = sphi 0, %s35
      %s38 = sphi 0, %s36
      %s50 = sphi 0, %s52
      %s53 = sphi 0, %s50
      %s54 = sphi 0, %s53
      %s70 = sphi 0, %s54
      %s78 = sphi 0, %s80
      %s81 = sphi 0, %s78
      %s82 = sphi 0, %s81
      %s98 = sphi 0, %s82
      %s106 = sphi 0, %s108
      %s109 = sphi 0, %s106
      %s110 = sphi 0, %s109
      %s126 = sphi 0, %s110
    $region4: #{tpu_custom_call.1} parent=1 // loop_header_branch
      %29 = sbr.rel (%p27) target = $region8
    $region5: #{tpu_custom_call.1} parent=1 // loop_body
      %s31 = ssub.s32 %s26, 1
      %s32 = ssub.s32 %s26, 2
      %s39 = sadd.s32 1, %s34
      %p40 = scmp.ge.s32.totalorder %s39, 2
      %s41 = scalar_select %p40, 0, %s39
      %s42 = sadd.s32 1, %s33
      %s43 = scalar_select %p40, %s42, %s33
      %p44 = scmp.ge.s32.totalorder %s43, 2
      %s45 = scalar_select %p44, 0, %s43
      %s46 = ssub.s32 %s33, %s45
      %s47 = ssub.s32 %s34, %s41
      %s48 = sor.u32 %s46, %s47
      %p49 = scmp.eq.s32.totalorder %s48, 0
      %s51 = sadd.s32 %s50, 1
      %s52 = scalar_select %p49, %s50, %s51
      %p55 = pneg %p49
      %p56 = scmp.eq.s32.totalorder %s26, 3
      %p57 = por %p55, %p56
      %p58 = scmp.ne.s32.totalorder %s50, %s53
      %p59 = scmp.eq.s32.totalorder %s26, 0
      %p60 = por %p58, %p59
      %p61 = scmp.ne.s32.totalorder %s50, %s53
      %p62 = scmp.eq.s32.totalorder %s31, 3
      %p63 = por %p61, %p62
      %p64 = scmp.ne.s32.totalorder %s53, %s54
      %p65 = scmp.eq.s32.totalorder %s31, 0
      %p66 = por %p64, %p65
      %p67 = scmp.ne.s32.totalorder %s53, %s54
      %p68 = scmp.eq.s32.totalorder %s32, 3
      %p69 = por %p67, %p68
      %p71 = scmp.ne.s32.totalorder %s54, %s70
      %p72 = scmp.eq.s32.totalorder %s32, 0
      %p73 = por %p71, %p72
      %s74 = ssub.s32 %s33, %s45
      %s75 = ssub.s32 %s34, %s41
      %s76 = sor.u32 %s74, %s75
      %p77 = scmp.eq.s32.totalorder %s76, 0
      %s79 = sadd.s32 %s78, 1
      %s80 = scalar_select %p77, %s78, %s79
      %p83 = pneg %p77
      %p84 = scmp.eq.s32.totalorder %s26, 3
      %p85 = por %p83, %p84
      %p86 = scmp.ne.s32.totalorder %s78, %s81
      %p87 = scmp.eq.s32.totalorder %s26, 0
      %p88 = por %p86, %p87
      %p89 = scmp.ne.s32.totalorder %s78, %s81
      %p90 = scmp.eq.s32.totalorder %s31, 3
      %p91 = por %p89, %p90
      %p92 = scmp.ne.s32.totalorder %s81, %s82
      %p93 = scmp.eq.s32.totalorder %s31, 0
      %p94 = por %p92, %p93
      %p95 = scmp.ne.s32.totalorder %s81, %s82
      %p96 = scmp.eq.s32.totalorder %s32, 3
      %p97 = por %p95, %p96
      %p99 = scmp.ne.s32.totalorder %s82, %s98
      %p100 = scmp.eq.s32.totalorder %s32, 0
      %p101 = por %p99, %p100
      %s102 = ssub.s32 %s33, %s45
      %s103 = ssub.s32 %s34, %s41
      %s104 = sor.u32 %s102, %s103
      %p105 = scmp.eq.s32.totalorder %s104, 0
      %s107 = sadd.s32 %s106, 1
      %s108 = scalar_select %p105, %s106, %s107
      %p111 = pneg %p105
      %p112 = scmp.eq.s32.totalorder %s26, 3
      %p113 = por %p111, %p112
      %p114 = scmp.ne.s32.totalorder %s106, %s109
      %p115 = scmp.eq.s32.totalorder %s26, 0
      %p116 = por %p114, %p115
      %p117 = scmp.ne.s32.totalorder %s106, %s109
      %p118 = scmp.eq.s32.totalorder %s31, 3
      %p119 = por %p117, %p118
      %p120 = scmp.ne.s32.totalorder %s109, %s110
      %p121 = scmp.eq.s32.totalorder %s31, 0
      %p122 = por %p120, %p121
      %p123 = scmp.ne.s32.totalorder %s109, %s110
      %p124 = scmp.eq.s32.totalorder %s32, 3
      %p125 = por %p123, %p124
      %p127 = scmp.ne.s32.totalorder %s110, %s126
      %p128 = scmp.eq.s32.totalorder %s32, 0
      %p129 = por %p127, %p128
      %p130 = scmp.le.s32.totalorder 1, %s26
      %p131 = scmp.lt.s32.totalorder %s26, 5
      %p132 = pnand %p130, %p131
      %p133 = pneg %p132
      // Predicated region
      $region9: #{tpu_custom_call.1} parent=5 // pred_check
        _
      $region10: #{tpu_custom_call.1} parent=5 // pred_check_branch
        %135 = sbr.rel (%p132) target = $region12
      $region11: #{tpu_custom_call.1} parent=5 // pred_region
        %s136 = ssub.s32 %s26, 1
      $region12: #{tpu_custom_call.1} parent=5 // pred_fallthru
        _
      %p137 = scmp.lt.s32.totalorder %s26, 4
      // Predicated region
      $region13: #{tpu_custom_call.1} parent=5 // pred_check
        %p138 = pneg %p137
      $region14: #{tpu_custom_call.1} parent=5 // pred_check_branch
        %140 = sbr.rel (%p138) target = $region16
      $region15: #{tpu_custom_call.1} parent=5 // pred_region
        // Predicated region
        $region17: #{tpu_custom_call.1} parent=15 // pred_check
          %p141 = pneg %p60
        $region18: #{tpu_custom_call.1} parent=15 // pred_check_branch
          %143 = sbr.rel (%p141) target = $region20
        $region19: #{tpu_custom_call.1} parent=15 // pred_region
          %s144 = sand.u32 %s50, 1
          %s145 = scalar_lea.sflag [#allocation6], %s144
          %s146 = sand.u32 %s50, 1
          %s147 = smul.addr %s146, 32
          %s148 = scalar_lea.vmem [#allocation5], %s147
          %s150 = ssub.s32 512, 512
          %151 = vsyncadd %s145, %s150
          %s152 = smul.addr %s33, 8
          %s153 = sadd.s32 %s34, %s152
          %s154 = smul.addr %s153, 128
          %s155 = scalar_lea.hbm %s2, %s154
          %s156 = sshll.u32 %s148, 4
          %s157 = int_to_ptr.vmem [resolvable:$true] %s156
          %162 = dma.hbm_to_vmem [thread:$0]  %s155, 512, %s157, %s145, 256, 128, 8
        $region20: #{tpu_custom_call.1} parent=15 // pred_fallthru
          _
      $region16: #{tpu_custom_call.1} parent=5 // pred_fallthru
        _
      %p163 = scmp.le.s32.totalorder 1, %s26
      %p164 = scmp.lt.s32.totalorder %s26, 5
      %p165 = pnand %p163, %p164
      %p166 = pneg %p165
      // Predicated region
      $region21: #{tpu_custom_call.1} parent=5 // pred_check
        _
      $region22: #{tpu_custom_call.1} parent=5 // pred_check_branch
        %168 = sbr.rel (%p165) target = $region24
      $region23: #{tpu_custom_call.1} parent=5 // pred_region
        %s169 = ssub.s32 %s26, 1
        %s170 = sand.u32 %s53, 1
        %s171 = scalar_lea.sflag [#allocation6], %s170
        %s172 = sand.u32 %s53, 1
        %s173 = smul.addr %s172, 32
        %s174 = scalar_lea.vmem [#allocation5], %s173
        // Predicated region
        $region25: #{tpu_custom_call.1} parent=23 // pred_check
          %p175 = pneg %p66
        $region26: #{tpu_custom_call.1} parent=23 // pred_check_branch
          %177 = sbr.rel (%p175) target = $region28
        $region27: #{tpu_custom_call.1} parent=23 // pred_region
          %178 = dma.done %s171, 512
        $region28: #{tpu_custom_call.1} parent=23 // pred_fallthru
          _
        %s179 = sand.u32 %s53, 1
        %s180 = scalar_lea.sflag [#allocation6], %s179
        %s181 = sand.u32 %s53, 1
        %s182 = smul.addr %s181, 32
        %s183 = scalar_lea.vmem [#allocation5], %s182
        %p184 = pneg %p66
        %p185 = pneg %p63
        %p186 = pneg %p94
        %p187 = pneg %p91
        %s188 = sand.u32 %s81, 1
        %s189 = scalar_lea.sflag [#allocation7], %s188
        %s190 = sand.u32 %s81, 1
        %s191 = smul.addr %s190, 32
        %s192 = scalar_lea.vmem [#allocation8], %s191
        %p193 = pneg %p122
        %p194 = pneg %p119
        %s195 = sand.u32 %s109, 1
        %s196 = scalar_lea.sflag [#allocation10], %s195
        %s197 = sand.u32 %s109, 1
        %s198 = smul.addr %s197, 32
        %s199 = scalar_lea.vmem [#allocation9], %s198
        %s200 = smul.u32 %s35, 128
        %s201 = sld [smem:[#allocation3 + %s200]]
        %s202 = sadd.s32 %s200, 1
        %s203 = sld [smem:[#allocation3 + %s202]]
        %s204 = sadd.s32 %s200, 2
        %s205 = sld [smem:[#allocation3 + %s204]]
        %s206 = sadd.s32 %s200, 8
        %s207 = sld [smem:[#allocation4 + %s206]]
        %s208 = sadd.s32 %s200, 9
        %s209 = sld [smem:[#allocation4 + %s208]]
        %v210 = vlaneseq
        %v211 = vshrl.u32 %v210, 7
        %v212 = vlaneseq
        %v213 = vand.u32 %v212, 127
        %s214 = smul.u32 %s36, 8
        %v215 = vstv %s214
        %v216 = vadd.s32 %v215, %v211
        %v217 = vmul.u32 %v216, 128
        %v218 = vadd.s32 %v217, %v213
        %v219 = vstv %s203
        %v220 = vxor.u32 %v216, %v219
        %v221 = vshra.s32 %v220, 16
        %v222 = vand.u32 %v221, 65535
        %v223 = vxor.u32 %v220, %v222
        %v224 = vmul.u32 %v223, 2146121005
        %v225 = vshra.s32 %v224, 15
        %v226 = vand.u32 %v225, 131071
        %v227 = vxor.u32 %v224, %v226
        %v228 = vmul.u32 %v227, 2221713035
        %v229 = vshra.s32 %v228, 16
        %v230 = vand.u32 %v229, 65535
        %v231 = vxor.u32 %v228, %v230
        %v232 = vand.u32 %v231, 16777215
        %v233 = vcvt.s32.f32 %v232
        %v234 = vadd.f32 %v233, 0.5
        %v235 = vmul.f32 %v234, 5.9604645e-08
        %v236 = vsub.f32 %v235, 0.5
        %v237 = vmul.f32 %v236, %v236
        %v238 = vmul.f32 %v237, -39.69683
        %v239 = vadd.f32 %v238, 220.9461
        %v240 = vmul.f32 %v239, %v237
        %v241 = vadd.f32 %v240, -275.9285
        %v242 = vmul.f32 %v241, %v237
        %v243 = vadd.f32 %v242, 138.35776
        %v244 = vmul.f32 %v243, %v237
        %v245 = vadd.f32 %v244, -30.664799
        %v246 = vmul.f32 %v245, %v237
        %v247 = vadd.f32 %v246, 2.5066283
        %v248 = vmul.f32 %v247, %v236
        %v249 = vmul.f32 %v237, -54.476097
        %v250 = vadd.f32 %v249, 161.58583
        %v251 = vmul.f32 %v250, %v237
        %v252 = vadd.f32 %v251, -155.69897
        %v253 = vmul.f32 %v252, %v237
        %v254 = vadd.f32 %v253, 66.801315
        %v255 = vmul.f32 %v254, %v237
        %v256 = vadd.f32 %v255, -13.280682
        %v257 = vmul.f32 %v256, %v237
        %v258 = vadd.f32 %v257, 1.0
        %v259 = vsub.f32 1.0, %v235
        %v260 = vmin.f32 %v235, %v259
        %v261 = vmax.f32 %v260, 1e-12
        %v262 = vlog2.pop %v261
        %v263 = vmul.f32 %v262, 0.6931472
        %v264 = vmul.f32 %v263, -2.0
        %v265 = vrsqrt.pop %v264
        %v266 = vmul.f32 %v264, %v265
        %vm267 = vcmp.eq.f32.partialorder %v264, inf
        %v268 = vsel %vm267, %v264, %v266
        %vm269 = vcmp.eq.f32.partialorder %v264, 0.0
        %v270 = vand.u32 %v264, 2147483648
        %v271 = vsel %vm269, %v270, %v268
        %v272 = vmul.f32 %v271, -0.007784894
        %v273 = vadd.f32 %v272, -0.32239646
        %v274 = vmul.f32 %v273, %v271
        %v275 = vadd.f32 %v274, -2.4007583
        %v276 = vmul.f32 %v275, %v271
        %v277 = vadd.f32 %v276, -2.5497324
        %v278 = vmul.f32 %v277, %v271
        %v279 = vadd.f32 %v278, 4.3746643
        %v280 = vmul.f32 %v279, %v271
        %v281 = vadd.f32 %v280, 2.938164
        %v282 = vmul.f32 %v271, 0.007784696
        %v283 = vadd.f32 %v282, 0.32246712
        %v284 = vmul.f32 %v283, %v271
        %v285 = vadd.f32 %v284, 2.4451342
        %v286 = vmul.f32 %v285, %v271
        %v287 = vadd.f32 %v286, 3.7544086
        %v288 = vmul.f32 %v287, %v271
        %v289 = vadd.f32 %v288, 1.0
        %vm290 = vcmp.lt.f32.partialorder %v236, 0.0
        %v291 = vsub.f32 0.0, %v281
        %v292 = vsel %vm290, %v281, %v291
        %vm293 = vcmp.gt.f32.partialorder %v261, 0.02425
        %v294 = vsel %vm293, %v248, %v292
        %v295 = vsel %vm293, %v258, %v289
        %v296 = vrcp.pop %v295
        %v297 = vmul.f32 %v294, %v296
        %v298 = vstv %s209
        %v299 = vmul.f32 %v297, %v298
        %v300 = vadd.s32 %v216, 16
        %v301 = vxor.u32 %v300, %v219
        %v302 = vshra.s32 %v301, 16
        %v303 = vand.u32 %v302, 65535
        %v304 = vxor.u32 %v301, %v303
        %v305 = vmul.u32 %v304, 2146121005
        %v306 = vshra.s32 %v305, 15
        %v307 = vand.u32 %v306, 131071
        %v308 = vxor.u32 %v305, %v307
        %v309 = vmul.u32 %v308, 2221713035
        %v310 = vshra.s32 %v309, 16
        %v311 = vand.u32 %v310, 65535
        %v312 = vxor.u32 %v309, %v311
        %v313 = vand.u32 %v312, 16777215
        %v314 = vcvt.s32.f32 %v313
        %v315 = vadd.f32 %v314, 0.5
        %v316 = vmul.f32 %v315, 5.9604645e-08
        %v317 = vsub.f32 %v316, 0.5
        %v318 = vmul.f32 %v317, %v317
        %v319 = vmul.f32 %v318, -39.69683
        %v320 = vadd.f32 %v319, 220.9461
        %v321 = vmul.f32 %v320, %v318
        %v322 = vadd.f32 %v321, -275.9285
        %v323 = vmul.f32 %v322, %v318
        %v324 = vadd.f32 %v323, 138.35776
        %v325 = vmul.f32 %v324, %v318
        %v326 = vadd.f32 %v325, -30.664799
        %v327 = vmul.f32 %v326, %v318
        %v328 = vadd.f32 %v327, 2.5066283
        %v329 = vmul.f32 %v328, %v317
        %v330 = vmul.f32 %v318, -54.476097
        %v331 = vadd.f32 %v330, 161.58583
        %v332 = vmul.f32 %v331, %v318
        %v333 = vadd.f32 %v332, -155.69897
        %v334 = vmul.f32 %v333, %v318
        %v335 = vadd.f32 %v334, 66.801315
        %v336 = vmul.f32 %v335, %v318
        %v337 = vadd.f32 %v336, -13.280682
        %v338 = vmul.f32 %v337, %v318
        %v339 = vadd.f32 %v338, 1.0
        %v340 = vsub.f32 1.0, %v316
        %v341 = vmin.f32 %v316, %v340
        %v342 = vmax.f32 %v341, 1e-12
        %v343 = vlog2.pop %v342
        %v344 = vmul.f32 %v343, 0.6931472
        %v345 = vmul.f32 %v344, -2.0
        %v346 = vrsqrt.pop %v345
        %v347 = vmul.f32 %v345, %v346
        %vm348 = vcmp.eq.f32.partialorder %v345, inf
        %v349 = vsel %vm348, %v345, %v347
        %vm350 = vcmp.eq.f32.partialorder %v345, 0.0
        %v351 = vand.u32 %v345, 2147483648
        %v352 = vsel %vm350, %v351, %v349
        %v353 = vmul.f32 %v352, -0.007784894
        %v354 = vadd.f32 %v353, -0.32239646
        %v355 = vmul.f32 %v354, %v352
        %v356 = vadd.f32 %v355, -2.4007583
        %v357 = vmul.f32 %v356, %v352
        %v358 = vadd.f32 %v357, -2.5497324
        %v359 = vmul.f32 %v358, %v352
        %v360 = vadd.f32 %v359, 4.3746643
        %v361 = vmul.f32 %v360, %v352
        %v362 = vadd.f32 %v361, 2.938164
        %v363 = vmul.f32 %v352, 0.007784696
        %v364 = vadd.f32 %v363, 0.32246712
        %v365 = vmul.f32 %v364, %v352
        %v366 = vadd.f32 %v365, 2.4451342
        %v367 = vmul.f32 %v366, %v352
        %v368 = vadd.f32 %v367, 3.7544086
        %v369 = vmul.f32 %v368, %v352
        %v370 = vadd.f32 %v369, 1.0
        %vm371 = vcmp.lt.f32.partialorder %v317, 0.0
        %v372 = vsub.f32 0.0, %v362
        %v373 = vsel %vm371, %v362, %v372
        %vm374 = vcmp.gt.f32.partialorder %v342, 0.02425
        %v375 = vsel %vm374, %v329, %v373
        %v376 = vsel %vm374, %v339, %v370
        %v377 = vrcp.pop %v376
        %v378 = vmul.f32 %v375, %v377
        %v379 = vmul.f32 %v378, %v298
        %s380 = sld [smem:[#allocation4 + %s200]]
        %s381 = sadd.s32 %s200, 4
        %s382 = sld [smem:[#allocation4 + %s381]]
        %s383 = sadd.s32 %s200, 10
        %s384 = sld [smem:[#allocation4 + %s383]]
        %v385 = vld [vmem:[%s174] sm:$0xff]
        %v386 = vmax.f32 %v385, 0.0
        %v387 = vmin.f32 %v386, 1.0
        %388 = vst [vmem:[%s192] sm:$0xff] %v387
        %v389 = vstv %s380
        %v390 = vmul.f32 %v387, %v389
        %v391 = vstv %s201
        %v392 = vxor.u32 %v218, %v391
        %v393 = vshra.s32 %v392, 16
        %v394 = vand.u32 %v393, 65535
        %v395 = vxor.u32 %v392, %v394
        %v396 = vmul.u32 %v395, 2146121005
        %v397 = vshra.s32 %v396, 15
        %v398 = vand.u32 %v397, 131071
        %v399 = vxor.u32 %v396, %v398
        %v400 = vmul.u32 %v399, 2221713035
        %v401 = vshra.s32 %v400, 16
        %v402 = vand.u32 %v401, 65535
        %v403 = vxor.u32 %v400, %v402
        %v404 = vand.u32 %v403, 16777215
        %v405 = vcvt.s32.f32 %v404
        %v406 = vadd.f32 %v405, 0.5
        %v407 = vmul.f32 %v406, 5.9604645e-08
        %v408 = vsub.f32 %v407, 0.5
        %v409 = vmul.f32 %v408, %v408
        %v410 = vmul.f32 %v409, -39.69683
        %v411 = vadd.f32 %v410, 220.9461
        %v412 = vmul.f32 %v411, %v409
        %v413 = vadd.f32 %v412, -275.9285
        %v414 = vmul.f32 %v413, %v409
        %v415 = vadd.f32 %v414, 138.35776
        %v416 = vmul.f32 %v415, %v409
        %v417 = vadd.f32 %v416, -30.664799
        %v418 = vmul.f32 %v417, %v409
        %v419 = vadd.f32 %v418, 2.5066283
        %v420 = vmul.f32 %v419, %v408
        %v421 = vmul.f32 %v409, -54.476097
        %v422 = vadd.f32 %v421, 161.58583
        %v423 = vmul.f32 %v422, %v409
        %v424 = vadd.f32 %v423, -155.69897
        %v425 = vmul.f32 %v424, %v409
        %v426 = vadd.f32 %v425, 66.801315
        %v427 = vmul.f32 %v426, %v409
        %v428 = vadd.f32 %v427, -13.280682
        %v429 = vmul.f32 %v428, %v409
        %v430 = vadd.f32 %v429, 1.0
        %v431 = vsub.f32 1.0, %v407
        %v432 = vmin.f32 %v407, %v431
        %v433 = vmax.f32 %v432, 1e-12
        %v434 = vlog2.pop %v433
        %v435 = vmul.f32 %v434, 0.6931472
        %v436 = vmul.f32 %v435, -2.0
        %v437 = vrsqrt.pop %v436
        %v438 = vmul.f32 %v436, %v437
        %vm439 = vcmp.eq.f32.partialorder %v436, inf
        %v440 = vsel %vm439, %v436, %v438
        %vm441 = vcmp.eq.f32.partialorder %v436, 0.0
        %v442 = vand.u32 %v436, 2147483648
        %v443 = vsel %vm441, %v442, %v440
        %v444 = vmul.f32 %v443, -0.007784894
        %v445 = vadd.f32 %v444, -0.32239646
        %v446 = vmul.f32 %v445, %v443
        %v447 = vadd.f32 %v446, -2.4007583
        %v448 = vmul.f32 %v447, %v443
        %v449 = vadd.f32 %v448, -2.5497324
        %v450 = vmul.f32 %v449, %v443
        %v451 = vadd.f32 %v450, 4.3746643
        %v452 = vmul.f32 %v451, %v443
        %v453 = vadd.f32 %v452, 2.938164
        %v454 = vmul.f32 %v443, 0.007784696
        %v455 = vadd.f32 %v454, 0.32246712
        %v456 = vmul.f32 %v455, %v443
        %v457 = vadd.f32 %v456, 2.4451342
        %v458 = vmul.f32 %v457, %v443
        %v459 = vadd.f32 %v458, 3.7544086
        %v460 = vmul.f32 %v459, %v443
        %v461 = vadd.f32 %v460, 1.0
        %vm462 = vcmp.lt.f32.partialorder %v408, 0.0
        %v463 = vsub.f32 0.0, %v453
        %v464 = vsel %vm462, %v453, %v463
        %vm465 = vcmp.gt.f32.partialorder %v433, 0.02425
        %v466 = vsel %vm465, %v420, %v464
        %v467 = vsel %vm465, %v430, %v461
        %v468 = vrcp.pop %v467
        %v469 = vmul.f32 %v466, %v468
        %v470 = vstv %s207
        %v471 = vmul.f32 %v469, %v470
        %v472 = vstv %s205
        %v473 = vxor.u32 %v218, %v472
        %v474 = vshra.s32 %v473, 16
        %v475 = vand.u32 %v474, 65535
        %v476 = vxor.u32 %v473, %v475
        %v477 = vmul.u32 %v476, 2146121005
        %v478 = vshra.s32 %v477, 15
        %v479 = vand.u32 %v478, 131071
        %v480 = vxor.u32 %v477, %v479
        %v481 = vmul.u32 %v480, 2221713035
        %v482 = vshra.s32 %v481, 16
        %v483 = vand.u32 %v482, 65535
        %v484 = vxor.u32 %v481, %v483
        %v485 = vand.u32 %v484, 16777215
        %v486 = vcvt.s32.f32 %v485
        %v487 = vadd.f32 %v486, 0.5
        %v488 = vmul.f32 %v487, 5.9604645e-08
        %v489 = vsub.f32 %v488, 0.5
        %v490 = vadd.f32 %v390, %v471
        %v491 = vadd.f32 %v490, %v299
        %v492 = vadd.f32 %v491, %v489
        %v493 = vstv %s384
        %v494 = vadd.f32 %v492, %v493
        %v495 = vstv %s382
        %v496 = vmul.f32 %v494, %v495
        %v497 = vmin.f32 %v496, 1.0
        %498 = vst [vmem:[%s199] sm:$0xff] %v497
        %s499 = sld [smem:[#allocation4 + %s202]]
        %s500 = sadd.s32 %s200, 5
        %s501 = sld [smem:[#allocation4 + %s500]]
        %s502 = sadd.s32 %s200, 11
        %s503 = sld [smem:[#allocation4 + %s502]]
        %s504 = scalar_lea.vmem %s174, 8 [#allocation5]
        %v505 = vld [vmem:[%s504] sm:$0xff]
        %v506 = vmax.f32 %v505, 0.0
        %v507 = vmin.f32 %v506, 1.0
        %s508 = scalar_lea.vmem %s192, 8 [#allocation8]
        %509 = vst [vmem:[%s508] sm:$0xff] %v507
        %v510 = vstv %s499
        %v511 = vmul.f32 %v507, %v510
        %v512 = vadd.s32 %v218, 2048
        %v513 = vxor.u32 %v512, %v391
        %v514 = vshra.s32 %v513, 16
        %v515 = vand.u32 %v514, 65535
        %v516 = vxor.u32 %v513, %v515
        %v517 = vmul.u32 %v516, 2146121005
        %v518 = vshra.s32 %v517, 15
        %v519 = vand.u32 %v518, 131071
        %v520 = vxor.u32 %v517, %v519
        %v521 = vmul.u32 %v520, 2221713035
        %v522 = vshra.s32 %v521, 16
        %v523 = vand.u32 %v522, 65535
        %v524 = vxor.u32 %v521, %v523
        %v525 = vand.u32 %v524, 16777215
        %v526 = vcvt.s32.f32 %v525
        %v527 = vadd.f32 %v526, 0.5
        %v528 = vmul.f32 %v527, 5.9604645e-08
        %v529 = vsub.f32 %v528, 0.5
        %v530 = vmul.f32 %v529, %v529
        %v531 = vmul.f32 %v530, -39.69683
        %v532 = vadd.f32 %v531, 220.9461
        %v533 = vmul.f32 %v532, %v530
        %v534 = vadd.f32 %v533, -275.9285
        %v535 = vmul.f32 %v534, %v530
        %v536 = vadd.f32 %v535, 138.35776
        %v537 = vmul.f32 %v536, %v530
        %v538 = vadd.f32 %v537, -30.664799
        %v539 = vmul.f32 %v538, %v530
        %v540 = vadd.f32 %v539, 2.5066283
        %v541 = vmul.f32 %v540, %v529
        %v542 = vmul.f32 %v530, -54.476097
        %v543 = vadd.f32 %v542, 161.58583
        %v544 = vmul.f32 %v543, %v530
        %v545 = vadd.f32 %v544, -155.69897
        %v546 = vmul.f32 %v545, %v530
        %v547 = vadd.f32 %v546, 66.801315
        %v548 = vmul.f32 %v547, %v530
        %v549 = vadd.f32 %v548, -13.280682
        %v550 = vmul.f32 %v549, %v530
        %v551 = vadd.f32 %v550, 1.0
        %v552 = vsub.f32 1.0, %v528
        %v553 = vmin.f32 %v528, %v552
        %v554 = vmax.f32 %v553, 1e-12
        %v555 = vlog2.pop %v554
        %v556 = vmul.f32 %v555, 0.6931472
        %v557 = vmul.f32 %v556, -2.0
        %v558 = vrsqrt.pop %v557
        %v559 = vmul.f32 %v557, %v558
        %vm560 = vcmp.eq.f32.partialorder %v557, inf
        %v561 = vsel %vm560, %v557, %v559
        %vm562 = vcmp.eq.f32.partialorder %v557, 0.0
        %v563 = vand.u32 %v557, 2147483648
        %v564 = vsel %vm562, %v563, %v561
        %v565 = vmul.f32 %v564, -0.007784894
        %v566 = vadd.f32 %v565, -0.32239646
        %v567 = vmul.f32 %v566, %v564
        %v568 = vadd.f32 %v567, -2.4007583
        %v569 = vmul.f32 %v568, %v564
        %v570 = vadd.f32 %v569, -2.5497324
        %v571 = vmul.f32 %v570, %v564
        %v572 = vadd.f32 %v571, 4.3746643
        %v573 = vmul.f32 %v572, %v564
        %v574 = vadd.f32 %v573, 2.938164
        %v575 = vmul.f32 %v564, 0.007784696
        %v576 = vadd.f32 %v575, 0.32246712
        %v577 = vmul.f32 %v576, %v564
        %v578 = vadd.f32 %v577, 2.4451342
        %v579 = vmul.f32 %v578, %v564
        %v580 = vadd.f32 %v579, 3.7544086
        %v581 = vmul.f32 %v580, %v564
        %v582 = vadd.f32 %v581, 1.0
        %vm583 = vcmp.lt.f32.partialorder %v529, 0.0
        %v584 = vsub.f32 0.0, %v574
        %v585 = vsel %vm583, %v574, %v584
        %vm586 = vcmp.gt.f32.partialorder %v554, 0.02425
        %v587 = vsel %vm586, %v541, %v585
        %v588 = vsel %vm586, %v551, %v582
        %v589 = vrcp.pop %v588
        %v590 = vmul.f32 %v587, %v589
        %v591 = vmul.f32 %v590, %v470
        %v592 = vxor.u32 %v512, %v472
        %v593 = vshra.s32 %v592, 16
        %v594 = vand.u32 %v593, 65535
        %v595 = vxor.u32 %v592, %v594
        %v596 = vmul.u32 %v595, 2146121005
        %v597 = vshra.s32 %v596, 15
        %v598 = vand.u32 %v597, 131071
        %v599 = vxor.u32 %v596, %v598
        %v600 = vmul.u32 %v599, 2221713035
        %v601 = vshra.s32 %v600, 16
        %v602 = vand.u32 %v601, 65535
        %v603 = vxor.u32 %v600, %v602
        %v604 = vand.u32 %v603, 16777215
        %v605 = vcvt.s32.f32 %v604
        %v606 = vadd.f32 %v605, 0.5
        %v607 = vmul.f32 %v606, 5.9604645e-08
        %v608 = vsub.f32 %v607, 0.5
        %v609 = vadd.f32 %v511, %v591
        %v610 = vadd.f32 %v609, %v299
        %v611 = vadd.f32 %v610, %v608
        %v612 = vstv %s503
        %v613 = vadd.f32 %v611, %v612
        %v614 = vstv %s501
        %v615 = vmul.f32 %v613, %v614
        %v616 = vmin.f32 %v615, 1.0
        %s617 = scalar_lea.vmem %s199, 8 [#allocation9]
        %618 = vst [vmem:[%s617] sm:$0xff] %v616
        %s619 = sld [smem:[#allocation4 + %s204]]
        %s620 = sadd.s32 %s200, 6
        %s621 = sld [smem:[#allocation4 + %s620]]
        %s622 = sadd.s32 %s200, 12
        %s623 = sld [smem:[#allocation4 + %s622]]
        %s624 = scalar_lea.vmem %s174, 16 [#allocation5]
        %v625 = vld [vmem:[%s624] sm:$0xff]
        %v626 = vmax.f32 %v625, 0.0
        %v627 = vmin.f32 %v626, 1.0
        %s628 = scalar_lea.vmem %s192, 16 [#allocation8]
        %629 = vst [vmem:[%s628] sm:$0xff] %v627
        %v630 = vstv %s619
        %v631 = vmul.f32 %v627, %v630
        %v632 = vadd.s32 %v218, 4096
        %v633 = vxor.u32 %v632, %v391
        %v634 = vshra.s32 %v633, 16
        %v635 = vand.u32 %v634, 65535
        %v636 = vxor.u32 %v633, %v635
        %v637 = vmul.u32 %v636, 2146121005
        %v638 = vshra.s32 %v637, 15
        %v639 = vand.u32 %v638, 131071
        %v640 = vxor.u32 %v637, %v639
        %v641 = vmul.u32 %v640, 2221713035
        %v642 = vshra.s32 %v641, 16
        %v643 = vand.u32 %v642, 65535
        %v644 = vxor.u32 %v641, %v643
        %v645 = vand.u32 %v644, 16777215
        %v646 = vcvt.s32.f32 %v645
        %v647 = vadd.f32 %v646, 0.5
        %v648 = vmul.f32 %v647, 5.9604645e-08
        %v649 = vsub.f32 %v648, 0.5
        %v650 = vmul.f32 %v649, %v649
        %v651 = vmul.f32 %v650, -39.69683
        %v652 = vadd.f32 %v651, 220.9461
        %v653 = vmul.f32 %v652, %v650
        %v654 = vadd.f32 %v653, -275.9285
        %v655 = vmul.f32 %v654, %v650
        %v656 = vadd.f32 %v655, 138.35776
        %v657 = vmul.f32 %v656, %v650
        %v658 = vadd.f32 %v657, -30.664799
        %v659 = vmul.f32 %v658, %v650
        %v660 = vadd.f32 %v659, 2.5066283
        %v661 = vmul.f32 %v660, %v649
        %v662 = vmul.f32 %v650, -54.476097
        %v663 = vadd.f32 %v662, 161.58583
        %v664 = vmul.f32 %v663, %v650
        %v665 = vadd.f32 %v664, -155.69897
        %v666 = vmul.f32 %v665, %v650
        %v667 = vadd.f32 %v666, 66.801315
        %v668 = vmul.f32 %v667, %v650
        %v669 = vadd.f32 %v668, -13.280682
        %v670 = vmul.f32 %v669, %v650
        %v671 = vadd.f32 %v670, 1.0
        %v672 = vsub.f32 1.0, %v648
        %v673 = vmin.f32 %v648, %v672
        %v674 = vmax.f32 %v673, 1e-12
        %v675 = vlog2.pop %v674
        %v676 = vmul.f32 %v675, 0.6931472
        %v677 = vmul.f32 %v676, -2.0
        %v678 = vrsqrt.pop %v677
        %v679 = vmul.f32 %v677, %v678
        %vm680 = vcmp.eq.f32.partialorder %v677, inf
        %v681 = vsel %vm680, %v677, %v679
        %vm682 = vcmp.eq.f32.partialorder %v677, 0.0
        %v683 = vand.u32 %v677, 2147483648
        %v684 = vsel %vm682, %v683, %v681
        %v685 = vmul.f32 %v684, -0.007784894
        %v686 = vadd.f32 %v685, -0.32239646
        %v687 = vmul.f32 %v686, %v684
        %v688 = vadd.f32 %v687, -2.4007583
        %v689 = vmul.f32 %v688, %v684
        %v690 = vadd.f32 %v689, -2.5497324
        %v691 = vmul.f32 %v690, %v684
        %v692 = vadd.f32 %v691, 4.3746643
        %v693 = vmul.f32 %v692, %v684
        %v694 = vadd.f32 %v693, 2.938164
        %v695 = vmul.f32 %v684, 0.007784696
        %v696 = vadd.f32 %v695, 0.32246712
        %v697 = vmul.f32 %v696, %v684
        %v698 = vadd.f32 %v697, 2.4451342
        %v699 = vmul.f32 %v698, %v684
        %v700 = vadd.f32 %v699, 3.7544086
        %v701 = vmul.f32 %v700, %v684
        %v702 = vadd.f32 %v701, 1.0
        %vm703 = vcmp.lt.f32.partialorder %v649, 0.0
        %v704 = vsub.f32 0.0, %v694
        %v705 = vsel %vm703, %v694, %v704
        %vm706 = vcmp.gt.f32.partialorder %v674, 0.02425
        %v707 = vsel %vm706, %v661, %v705
        %v708 = vsel %vm706, %v671, %v702
        %v709 = vrcp.pop %v708
        %v710 = vmul.f32 %v707, %v709
        %v711 = vmul.f32 %v710, %v470
        %v712 = vxor.u32 %v632, %v472
        %v713 = vshra.s32 %v712, 16
        %v714 = vand.u32 %v713, 65535
        %v715 = vxor.u32 %v712, %v714
        %v716 = vmul.u32 %v715, 2146121005
        %v717 = vshra.s32 %v716, 15
        %v718 = vand.u32 %v717, 131071
        %v719 = vxor.u32 %v716, %v718
        %v720 = vmul.u32 %v719, 2221713035
        %v721 = vshra.s32 %v720, 16
        %v722 = vand.u32 %v721, 65535
        %v723 = vxor.u32 %v720, %v722
        %v724 = vand.u32 %v723, 16777215
        %v725 = vcvt.s32.f32 %v724
        %v726 = vadd.f32 %v725, 0.5
        %v727 = vmul.f32 %v726, 5.9604645e-08
        %v728 = vsub.f32 %v727, 0.5
        %v729 = vadd.f32 %v631, %v711
        %v730 = vadd.f32 %v729, %v379
        %v731 = vadd.f32 %v730, %v728
        %v732 = vstv %s623
        %v733 = vadd.f32 %v731, %v732
        %v734 = vstv %s621
        %v735 = vmul.f32 %v733, %v734
        %v736 = vmin.f32 %v735, 1.0
        %s737 = scalar_lea.vmem %s199, 16 [#allocation9]
        %738 = vst [vmem:[%s737] sm:$0xff] %v736
        %s739 = sadd.s32 %s200, 3
        %s740 = sld [smem:[#allocation4 + %s739]]
        %s741 = sadd.s32 %s200, 7
        %s742 = sld [smem:[#allocation4 + %s741]]
        %s743 = sadd.s32 %s200, 13
        %s744 = sld [smem:[#allocation4 + %s743]]
        %s745 = scalar_lea.vmem %s174, 24 [#allocation5]
        %v746 = vld [vmem:[%s745] sm:$0xff]
        %v747 = vmax.f32 %v746, 0.0
        %v748 = vmin.f32 %v747, 1.0
        %s749 = scalar_lea.vmem %s192, 24 [#allocation8]
        %750 = vst [vmem:[%s749] sm:$0xff] %v748
        %v751 = vstv %s740
        %v752 = vmul.f32 %v748, %v751
        %v753 = vadd.s32 %v218, 6144
        %v754 = vxor.u32 %v753, %v391
        %v755 = vshra.s32 %v754, 16
        %v756 = vand.u32 %v755, 65535
        %v757 = vxor.u32 %v754, %v756
        %v758 = vmul.u32 %v757, 2146121005
        %v759 = vshra.s32 %v758, 15
        %v760 = vand.u32 %v759, 131071
        %v761 = vxor.u32 %v758, %v760
        %v762 = vmul.u32 %v761, 2221713035
        %v763 = vshra.s32 %v762, 16
        %v764 = vand.u32 %v763, 65535
        %v765 = vxor.u32 %v762, %v764
        %v766 = vand.u32 %v765, 16777215
        %v767 = vcvt.s32.f32 %v766
        %v768 = vadd.f32 %v767, 0.5
        %v769 = vmul.f32 %v768, 5.9604645e-08
        %v770 = vsub.f32 %v769, 0.5
        %v771 = vmul.f32 %v770, %v770
        %v772 = vmul.f32 %v771, -39.69683
        %v773 = vadd.f32 %v772, 220.9461
        %v774 = vmul.f32 %v773, %v771
        %v775 = vadd.f32 %v774, -275.9285
        %v776 = vmul.f32 %v775, %v771
        %v777 = vadd.f32 %v776, 138.35776
        %v778 = vmul.f32 %v777, %v771
        %v779 = vadd.f32 %v778, -30.664799
        %v780 = vmul.f32 %v779, %v771
        %v781 = vadd.f32 %v780, 2.5066283
        %v782 = vmul.f32 %v781, %v770
        %v783 = vmul.f32 %v771, -54.476097
        %v784 = vadd.f32 %v783, 161.58583
        %v785 = vmul.f32 %v784, %v771
        %v786 = vadd.f32 %v785, -155.69897
        %v787 = vmul.f32 %v786, %v771
        %v788 = vadd.f32 %v787, 66.801315
        %v789 = vmul.f32 %v788, %v771
        %v790 = vadd.f32 %v789, -13.280682
        %v791 = vmul.f32 %v790, %v771
        %v792 = vadd.f32 %v791, 1.0
        %v793 = vsub.f32 1.0, %v769
        %v794 = vmin.f32 %v769, %v793
        %v795 = vmax.f32 %v794, 1e-12
        %v796 = vlog2.pop %v795
        %v797 = vmul.f32 %v796, 0.6931472
        %v798 = vmul.f32 %v797, -2.0
        %v799 = vrsqrt.pop %v798
        %v800 = vmul.f32 %v798, %v799
        %vm801 = vcmp.eq.f32.partialorder %v798, inf
        %v802 = vsel %vm801, %v798, %v800
        %vm803 = vcmp.eq.f32.partialorder %v798, 0.0
        %v804 = vand.u32 %v798, 2147483648
        %v805 = vsel %vm803, %v804, %v802
        %v806 = vmul.f32 %v805, -0.007784894
        %v807 = vadd.f32 %v806, -0.32239646
        %v808 = vmul.f32 %v807, %v805
        %v809 = vadd.f32 %v808, -2.4007583
        %v810 = vmul.f32 %v809, %v805
        %v811 = vadd.f32 %v810, -2.5497324
        %v812 = vmul.f32 %v811, %v805
        %v813 = vadd.f32 %v812, 4.3746643
        %v814 = vmul.f32 %v813, %v805
        %v815 = vadd.f32 %v814, 2.938164
        %v816 = vmul.f32 %v805, 0.007784696
        %v817 = vadd.f32 %v816, 0.32246712
        %v818 = vmul.f32 %v817, %v805
        %v819 = vadd.f32 %v818, 2.4451342
        %v820 = vmul.f32 %v819, %v805
        %v821 = vadd.f32 %v820, 3.7544086
        %v822 = vmul.f32 %v821, %v805
        %v823 = vadd.f32 %v822, 1.0
        %vm824 = vcmp.lt.f32.partialorder %v770, 0.0
        %v825 = vsub.f32 0.0, %v815
        %v826 = vsel %vm824, %v815, %v825
        %vm827 = vcmp.gt.f32.partialorder %v795, 0.02425
        %v828 = vsel %vm827, %v782, %v826
        %v829 = vsel %vm827, %v792, %v823
        %v830 = vrcp.pop %v829
        %v831 = vmul.f32 %v828, %v830
        %v832 = vmul.f32 %v831, %v470
        %v833 = vxor.u32 %v753, %v472
        %v834 = vshra.s32 %v833, 16
        %v835 = vand.u32 %v834, 65535
        %v836 = vxor.u32 %v833, %v835
        %v837 = vmul.u32 %v836, 2146121005
        %v838 = vshra.s32 %v837, 15
        %v839 = vand.u32 %v838, 131071
        %v840 = vxor.u32 %v837, %v839
        %v841 = vmul.u32 %v840, 2221713035
        %v842 = vshra.s32 %v841, 16
        %v843 = vand.u32 %v842, 65535
        %v844 = vxor.u32 %v841, %v843
        %v845 = vand.u32 %v844, 16777215
        %v846 = vcvt.s32.f32 %v845
        %v847 = vadd.f32 %v846, 0.5
        %v848 = vmul.f32 %v847, 5.9604645e-08
        %v849 = vsub.f32 %v848, 0.5
        %v850 = vadd.f32 %v752, %v832
        %v851 = vadd.f32 %v850, %v379
        %v852 = vadd.f32 %v851, %v849
        %v853 = vstv %s744
        %v854 = vadd.f32 %v852, %v853
        %v855 = vstv %s742
        %v856 = vmul.f32 %v854, %v855
        %v857 = vmin.f32 %v856, 1.0
        %s858 = scalar_lea.vmem %s199, 24 [#allocation9]
        %859 = vst [vmem:[%s858] sm:$0xff] %v857
        %s860 = sand.u32 %s81, 1
        %s861 = scalar_lea.sflag [#allocation7], %s860
        %s862 = sand.u32 %s81, 1
        %s863 = smul.addr %s862, 32
        %s864 = scalar_lea.vmem [#allocation8], %s863
        %s865 = sand.u32 %s109, 1
        %s866 = scalar_lea.sflag [#allocation10], %s865
        %s867 = sand.u32 %s109, 1
        %s868 = smul.addr %s867, 32
        %s869 = scalar_lea.vmem [#allocation9], %s868
        // Predicated region
        $region29: #{tpu_custom_call.1} parent=23 // pred_check
          %p870 = pneg %p91
        $region30: #{tpu_custom_call.1} parent=23 // pred_check_branch
          %872 = sbr.rel (%p870) target = $region32
        $region31: #{tpu_custom_call.1} parent=23 // pred_region
          %s874 = ssub.s32 512, 512
          %875 = vsyncadd %s861, %s874
          %s876 = smul.addr %s35, 8
          %s877 = sadd.s32 %s36, %s876
          %s878 = smul.addr %s877, 128
          %s879 = scalar_lea.hbm %s3, %s878
          %s880 = sshll.u32 %s864, 4
          %s881 = int_to_ptr.vmem [resolvable:$true] %s880
          %886 = dma.vmem_to_hbm [thread:$0]  %s881, 512, %s879, %s861, 128, 256, 8
        $region32: #{tpu_custom_call.1} parent=23 // pred_fallthru
          _
        // Predicated region
        $region33: #{tpu_custom_call.1} parent=23 // pred_check
          %p887 = pneg %p119
        $region34: #{tpu_custom_call.1} parent=23 // pred_check_branch
          %889 = sbr.rel (%p887) target = $region36
        $region35: #{tpu_custom_call.1} parent=23 // pred_region
          %s891 = ssub.s32 512, 512
          %892 = vsyncadd %s866, %s891
          %s893 = smul.addr %s35, 8
          %s894 = sadd.s32 %s36, %s893
          %s895 = smul.addr %s894, 128
          %s896 = scalar_lea.hbm %s4, %s895
          %s897 = sshll.u32 %s869, 4
          %s898 = int_to_ptr.vmem [resolvable:$true] %s897
          %903 = dma.vmem_to_hbm [thread:$0]  %s898, 512, %s896, %s866, 128, 256, 8
        $region36: #{tpu_custom_call.1} parent=23 // pred_fallthru
          _
      $region24: #{tpu_custom_call.1} parent=5 // pred_fallthru
        _
      %p904 = scmp.le.s32.totalorder 2, %s26
      // Predicated region
      $region37: #{tpu_custom_call.1} parent=5 // pred_check
        %p905 = pneg %p904
      $region38: #{tpu_custom_call.1} parent=5 // pred_check_branch
        %907 = sbr.rel (%p905) target = $region40
      $region39: #{tpu_custom_call.1} parent=5 // pred_region
        %s908 = ssub.s32 %s26, 2
        // Predicated region
        $region41: #{tpu_custom_call.1} parent=39 // pred_check
          %p909 = pneg %p97
        $region42: #{tpu_custom_call.1} parent=39 // pred_check_branch
          %911 = sbr.rel (%p909) target = $region44
        $region43: #{tpu_custom_call.1} parent=39 // pred_region
          %s912 = sand.u32 %s82, 1
          %s913 = scalar_lea.sflag [#allocation7], %s912
          %s914 = sand.u32 %s82, 1
          %s915 = smul.addr %s914, 32
          %s916 = scalar_lea.vmem [#allocation8], %s915
          %917 = dma.done %s913, 512
        $region44: #{tpu_custom_call.1} parent=39 // pred_fallthru
          _
        // Predicated region
        $region45: #{tpu_custom_call.1} parent=39 // pred_check
          %p918 = pneg %p125
        $region46: #{tpu_custom_call.1} parent=39 // pred_check_branch
          %920 = sbr.rel (%p918) target = $region48
        $region47: #{tpu_custom_call.1} parent=39 // pred_region
          %s921 = sand.u32 %s110, 1
          %s922 = scalar_lea.sflag [#allocation10], %s921
          %s923 = sand.u32 %s110, 1
          %s924 = smul.addr %s923, 32
          %s925 = scalar_lea.vmem [#allocation9], %s924
          %926 = dma.done %s922, 512
        $region48: #{tpu_custom_call.1} parent=39 // pred_fallthru
          _
      $region40: #{tpu_custom_call.1} parent=5 // pred_fallthru
        _
    $region6: #{tpu_custom_call.1} parent=1 // loop_footer
      %s30 = sadd.s32 1, %s26
    $region7: #{tpu_custom_call.1} parent=1 // loop_footer_branch
      %25 = sbr.rel target = $region3
    $region8: #{tpu_custom_call.1} parent=1 // loop_exit
      _
    %927 = vsyncpa [#allocation6], 1
    %s928 = scalar_lea.sflag [#allocation6], 1
    %929 = vsyncpa %s928, 1
    %930 = vsyncpa [#allocation7], 1
    %s931 = scalar_lea.sflag [#allocation7], 1
    %932 = vsyncpa %s931, 1
    %933 = vsyncpa [#allocation10], 1
    %s934 = scalar_lea.sflag [#allocation10], 1
    %935 = vsyncpa %s934, 1

</llo_original>
